<compile_context>
chip_gen: v6e
topology: v6e:2x2x1
jax: 0.10.0
libtpu: 0.0.40
codegen_flags: <defaults>
</compile_context>

<pallas_src>
import math
import functools

import jax
import jax.numpy as jnp
from jax import lax
from jax.experimental import pallas as pl
from jax.experimental.pallas import tpu as pltpu


# rank-2 A @ B^T (contract the last dim of both operands)
_CONTRACT_LAST2 = (((1,), (1,)), ((), ()))
# rank-3 lhs, rank-2 rhs, contract the last dim of both (reference only)
_CONTRACT_LAST3 = (((2,), (1,)), ((), ()))


# ----------------------------- Pallas kernels -----------------------------

def _rnn_stack_kernel(x_ref, wih_ref, whh_ref, b_ref, g_ref, beta_ref,
                      y_ref, h_state):
    """Fused prenorm + num_layers tanh-RNN over one time chunk.

    x_ref   : (Tc, Bp, D) f32  time-major chunk of scaled embeddings
    wih_ref : (L, D, D)  bf16  PyTorch (out, in) layout
    whh_ref : (L, D, D)  bf16
    b_ref   : (L, 1, D)  f32   b_ih + b_hh (folded once in the wrapper)
    g_ref   : (1, 1, D)  f32   prenorm gamma
    beta_ref: (1, 1, D)  f32   prenorm beta
    y_ref   : (Tc, Bp, D) f32  output chunk (last layer hidden states); also
                               used as the inter-layer working buffer.
    h_state : (L, Bp, D) f32   VMEM scratch, persists across time-chunk steps.
    """
    tc, bp, d = x_ref.shape
    num_layers = wih_ref.shape[0]

    @pl.when(pl.program_id(0) == 0)
    def _init():
        h_state[...] = jnp.zeros_like(h_state)

    # Fused prenorm (f32 math on the VPU/EUP path).
    x = x_ref[...]
    mean = jnp.mean(x, axis=-1, keepdims=True)
    var = jnp.mean(jnp.square(x - mean), axis=-1, keepdims=True)
    x = (x - mean) * lax.rsqrt(var + 1e-5) * g_ref[...] + beta_ref[...]

    for layer in range(num_layers):            # static unroll, L is small
        w_ih = wih_ref[layer]                  # (D, D) bf16
        w_hh = whh_ref[layer]                  # (D, D) bf16
        bias = b_ref[layer]                    # (1, D) f32

        inp = x if layer == 0 else y_ref[...]  # (Tc, Bp, D) f32
        # Hoisted input projection for the whole chunk: one big MXU matmul
        # (bf16 operands, f32 accumulation) with the folded bias added once.
        xp = lax.dot_general(
            inp.reshape(tc * bp, d).astype(jnp.bfloat16), w_ih,
            _CONTRACT_LAST2, preferred_element_type=jnp.float32) + bias
        # Stash the projected inputs in the output buffer; each timestep
        # reads its own row-group once and then overwrites it with h_t.
        y_ref[...] = xp.reshape(tc, bp, d)

        def step(t, h_prev, w_hh=w_hh):
            pre = y_ref[t] + lax.dot_general(
                h_prev.astype(jnp.bfloat16), w_hh,
                _CONTRACT_LAST2, preferred_element_type=jnp.float32)
            h = jnp.tanh(pre)                  # f32
            y_ref[t] = h                       # dense (8, 128)-tile store
            return h                           # carried in vregs

        h_state[layer] = lax.fori_loop(0, tc, step, h_state[layer],
                                       unroll=True)


def _fc_postnorm_kernel(x_ref, g_ref, b_ref, w_ref, fcb_ref, o_ref):
    """Fused postnorm LayerNorm + tied-weight output projection (one tile).

    x_ref: (tn, D) f32, g/b: (1, D) f32, w_ref: (tv, D) bf16 (tied embedding
    rows), fcb_ref: (1, tv) f32, o_ref: (tn, tv) f32.
    """
    x = x_ref[...]
    mean = jnp.mean(x, axis=-1, keepdims=True)
    var = jnp.mean(jnp.square(x - mean), axis=-1, keepdims=True)
    xn = (x - mean) * lax.rsqrt(var + 1e-5) * g_ref[...] + b_ref[...]
    o_ref[...] = lax.dot_general(
        xn.astype(jnp.bfloat16), w_ref[...],
        _CONTRACT_LAST2, preferred_element_type=jnp.float32) + fcb_ref[...]


# ------------------------------ wrappers -----------------------------------

def _pick_tile(n, cap, quantum):
    """Largest tile <= cap that divides n and is a multiple of quantum
    (falls back to the full dimension, which is always legal)."""
    if n <= cap:
        return n
    for t in range(cap, 0, -1):
        if n % t == 0 and t % quantum == 0:
            return t
    return n


def rnn_stack(x_tbd, w_ih, w_hh, b_sum, pre_g, pre_b, *, time_chunk=8):
    t, bp, d = x_tbd.shape
    n_layers = w_ih.shape[0]
    tc = _pick_tile(t, time_chunk, 1)
    return pl.pallas_call(
        _rnn_stack_kernel,
        out_shape=jax.ShapeDtypeStruct((t, bp, d), jnp.float32),
        grid=(t // tc,),
        in_specs=[
            pl.BlockSpec((tc, bp, d), lambda c: (c, 0, 0)),
            pl.BlockSpec((n_layers, d, d), lambda c: (0, 0, 0)),
            pl.BlockSpec((n_layers, d, d), lambda c: (0, 0, 0)),
            pl.BlockSpec((n_layers, 1, d), lambda c: (0, 0, 0)),
            pl.BlockSpec((1, 1, d), lambda c: (0, 0, 0)),
            pl.BlockSpec((1, 1, d), lambda c: (0, 0, 0)),
        ],
        out_specs=pl.BlockSpec((tc, bp, d), lambda c: (c, 0, 0)),
        scratch_shapes=[pltpu.VMEM((n_layers, bp, d), jnp.float32)],
        compiler_params=pltpu.CompilerParams(
            dimension_semantics=("arbitrary",),        # recurrence is serial
            vmem_limit_bytes=32 * 1024 * 1024),
    )(x_tbd, w_ih, w_hh, b_sum, pre_g, pre_b)


def fc_postnorm(x2d, post_g, post_b, emb_bf16, fc_b, *,
                block_rows=128, block_vocab=256):
    n, d = x2d.shape
    v = emb_bf16.shape[0]
    tn = _pick_tile(n, block_rows, 8)
    tv = _pick_tile(v, block_vocab, 128)
    return pl.pallas_call(
        _fc_postnorm_kernel,
        out_shape=jax.ShapeDtypeStruct((n, v), jnp.float32),
        grid=(n // tn, v // tv),
        in_specs=[
            pl.BlockSpec((tn, d), lambda i, j: (i, 0)),
            pl.BlockSpec((1, d), lambda i, j: (0, 0)),
            pl.BlockSpec((1, d), lambda i, j: (0, 0)),
            pl.BlockSpec((tv, d), lambda i, j: (j, 0)),
            pl.BlockSpec((1, tv), lambda i, j: (0, j)),
        ],
        out_specs=pl.BlockSpec((tn, tv), lambda i, j: (i, j)),
        compiler_params=pltpu.CompilerParams(
            dimension_semantics=("parallel", "parallel"),
            vmem_limit_bytes=32 * 1024 * 1024),
    )(x2d, post_g, post_b, emb_bf16, fc_b)


@functools.partial(jax.jit, static_argnames=("d_model", "num_layers"))
def rnnlm_forward(tokens, params, *, d_model, num_layers):
    """tokens: (B, T) int32 -> logits (B, T, V).  Eval mode (dropout = id)."""
    B, T = tokens.shape
    emb = params["embedding"]                        # (V, D) f32
    V = emb.shape[0]
    Bp = ((B + 7) // 8) * 8                          # pad batch to sublane mult

    # Time-major embedding: only the tiny int token array is transposed.
    tok_t = jnp.pad(tokens.T, ((0, 0), (0, Bp - B)))               # (T, Bp)
    x = (jnp.take(emb, tok_t, axis=0) * math.sqrt(d_model)).astype(jnp.float32)

    # TODO(synk): training-mode input dropout not implemented (eval identity).

    # Stack/cast weights to bf16 once and fold the two biases.
    w_ih = jnp.stack([params[f"w_ih_{l}"] for l in range(num_layers)]
                     ).astype(jnp.bfloat16)                        # (L, D, D)
    w_hh = jnp.stack([params[f"w_hh_{l}"] for l in range(num_layers)]
                     ).astype(jnp.bfloat16)                        # (L, D, D)
    b_sum = jnp.stack([params[f"b_ih_{l}"] + params[f"b_hh_{l}"]
                       for l in range(num_layers)])[:, None, :]    # (L, 1, D)

    y = rnn_stack(x, w_ih, w_hh, b_sum,
                  params["prenorm_g"].reshape(1, 1, d_model),
                  params["prenorm_b"].reshape(1, 1, d_model))      # (T, Bp, D)

    # Drop batch padding; single remaining activation transpose (-> batch-major
    # rows for the FC, cheaper than transposing the (B, T, V) logits).
    y2d = jnp.transpose(y[:, :B, :], (1, 0, 2)).reshape(B * T, d_model)

    # TODO(synk): training-mode output dropout not implemented (eval identity).

    logits = fc_postnorm(y2d,
                         params["postnorm_g"].reshape(1, d_model),
                         params["postnorm_b"].reshape(1, d_model),
                         emb.astype(jnp.bfloat16),
                         params["fc_b"].reshape(1, V))             # (B*T, V)
    return logits.reshape(B, T, V)


# -------------------------- pure-JAX reference ------------------------------
# Mirrors the kernel numerics (bf16 matmul operands, f32 accumulation, f32
# LayerNorm / tanh) so the comparison checks kernel structure, not bf16 error.

def rnnlm_reference(tokens, params, *, d_model, num_layers):
    B, T = tokens.shape
    emb = params["embedding"]
    x = jnp.take(emb, tokens, axis=0) * math.sqrt(d_model)

    def ln(v, g, b):
        m = v.mean(-1, keepdims=True)
        var = ((v - m) ** 2).mean(-1, keepdims=True)
        return (v - m) * lax.rsqrt(var + 1e-5) * g + b

    h_in = ln(x, params["prenorm_g"], params["prenorm_b"])
    for l in range(num_layers):
        w_ih = params[f"w_ih_{l}"].astype(jnp.bfloat16)
        w_hh = params[f"w_hh_{l}"].astype(jnp.bfloat16)
        bias = params[f"b_ih_{l}"] + params[f"b_hh_{l}"]
        xp = lax.dot_general(h_in.astype(jnp.bfloat16), w_ih, _CONTRACT_LAST3,
                             preferred_element_type=jnp.float32) + bias
        h = jnp.zeros((B, d_model), jnp.float32)
        hs = []
        for t in range(T):
            pre = xp[:, t] + lax.dot_general(
                h.astype(jnp.bfloat16), w_hh, _CONTRACT_LAST2,
                preferred_element_type=jnp.float32)
            h = jnp.tanh(pre)
            hs.append(h)
        h_in = jnp.stack(hs, axis=1)
    y = ln(h_in, params["postnorm_g"], params["postnorm_b"])
    return lax.dot_general(y.astype(jnp.bfloat16), emb.astype(jnp.bfloat16),
                           _CONTRACT_LAST3,
                           preferred_element_type=jnp.float32) + params["fc_b"]


# --------------------------------- main --------------------------------------

if __name__ == "__main__":
    vocab_size, d_model, num_layers = 512, 128, 2
    B, T = 2, 16

    key = jax.random.PRNGKey(0)
    keys = jax.random.split(key, 6 + 4 * num_layers)

    params = {
        "embedding": 0.02 * jax.random.normal(keys[0], (vocab_size, d_model),
                                              jnp.float32),
        "prenorm_g": 1.0 + 0.1 * jax.random.normal(keys[1], (d_model,),
                                                   jnp.float32),
        "prenorm_b": 0.1 * jax.random.normal(keys[2], (d_model,), jnp.float32),
        "postnorm_g": 1.0 + 0.1 * jax.random.normal(keys[3], (d_model,),
                                                    jnp.float32),
        "postnorm_b": 0.1 * jax.random.normal(keys[4], (d_model,), jnp.float32),
        "fc_b": 0.02 * jax.random.normal(keys[5], (vocab_size,), jnp.float32),
    }
    k = 1.0 / math.sqrt(d_model)
    for l in range(num_layers):
        k0, k1, k2, k3 = keys[6 + 4 * l: 6 + 4 * (l + 1)]
        params[f"w_ih_{l}"] = jax.random.uniform(k0, (d_model, d_model),
                                                 jnp.float32, -k, k)
        params[f"w_hh_{l}"] = jax.random.uniform(k1, (d_model, d_model),
                                                 jnp.float32, -k, k)
        params[f"b_ih_{l}"] = jax.random.uniform(k2, (d_model,),
                                                 jnp.float32, -k, k)
        params[f"b_hh_{l}"] = jax.random.uniform(k3, (d_model,),
                                                 jnp.float32, -k, k)

    tokens = jax.random.randint(jax.random.PRNGKey(42), (B, T), 0, vocab_size,
                                dtype=jnp.int32)

    logits = rnnlm_forward(tokens, params, d_model=d_model,
                           num_layers=num_layers)
    logits = jax.block_until_ready(logits)

    ref = rnnlm_reference(tokens, params, d_model=d_model,
                          num_layers=num_layers)
    ref = jax.block_until_ready(ref)

    assert logits.shape == (B, T, vocab_size)
    max_err = jnp.max(jnp.abs(logits - ref))
    assert jnp.allclose(logits, ref, atol=2e-3, rtol=2e-3), (
        f"mismatch vs reference (max abs err {max_err:.3e})")

    print("KERNEL_OK")
</pallas_src>

<mosaic_0001>
module attributes {stable_mosaic.version = 11 : i64} {
  func.func @_rnn_stack_kernel(%arg0: i32, %arg1: memref<8x8x128xf32, #tpu.memory_space<vmem>>, %arg2: memref<2x128x128xbf16, #tpu.memory_space<vmem>>, %arg3: memref<2x128x128xbf16, #tpu.memory_space<vmem>>, %arg4: memref<2x1x128xf32, #tpu.memory_space<vmem>>, %arg5: memref<1x1x128xf32, #tpu.memory_space<vmem>>, %arg6: memref<1x1x128xf32, #tpu.memory_space<vmem>>, %arg7: memref<8x8x128xf32, #tpu.memory_space<vmem>>, %arg8: memref<2x8x128xf32, #tpu.memory_space<vmem>>) attributes {dimension_semantics = [#tpu.dimension_semantics<arbitrary>], iteration_bounds = array<i64: 2>, scalar_prefetch = 0 : i64, scratch_operands = 1 : i64, tpu.core_type = #tpu.core_type<tc>, window_params = [{transform_indices = @transform_0, window_bounds = array<i64: 8, 8, 128>}, {pipeline_mode = #tpu.pipeline_mode<synchronous>, transform_indices = @transform_1, window_bounds = array<i64: 2, 128, 128>}, {pipeline_mode = #tpu.pipeline_mode<synchronous>, transform_indices = @transform_2, window_bounds = array<i64: 2, 128, 128>}, {pipeline_mode = #tpu.pipeline_mode<synchronous>, transform_indices = @transform_3, window_bounds = array<i64: 2, 1, 128>}, {pipeline_mode = #tpu.pipeline_mode<synchronous>, transform_indices = @transform_4, window_bounds = array<i64: 1, 1, 128>}, {pipeline_mode = #tpu.pipeline_mode<synchronous>, transform_indices = @transform_5, window_bounds = array<i64: 1, 1, 128>}, {transform_indices = @transform_6, window_bounds = array<i64: 8, 8, 128>}]} {
    %c0_i32 = arith.constant 0 : i32
    %0 = arith.cmpi eq, %arg0, %c0_i32 : i32
    %1 = arith.extui %0 : i1 to i32
    %c0_i32_0 = arith.constant 0 : i32
    %2 = arith.cmpi ne, %1, %c0_i32_0 : i32
    scf.if %2 {
      %cst_143 = arith.constant 0.000000e+00 : f32
      %241 = vector.broadcast %cst_143 : f32 to vector<2x8x128xf32>
      %c0_144 = arith.constant 0 : index
      %c0_145 = arith.constant 0 : index
      %c0_146 = arith.constant 0 : index
      %242 = vector.load %arg8[%c0_144, %c0_145, %c0_146] : memref<2x8x128xf32, #tpu.memory_space<vmem>>, vector<2x8x128xf32>
      tpu.vector_store %arg8[%c0_144, %c0_145, %c0_146], %241 {strides = array<i32>} : memref<2x8x128xf32, #tpu.memory_space<vmem>>, vector<2x8x128xf32>,
    } else {
    }
    %c0 = arith.constant 0 : index
    %c0_1 = arith.constant 0 : index
    %c0_2 = arith.constant 0 : index
    %3 = vector.load %arg1[%c0, %c0_1, %c0_2] : memref<8x8x128xf32, #tpu.memory_space<vmem>>, vector<8x8x128xf32>
    %cst = arith.constant dense<0.000000e+00> : vector<8x8xf32>
    %4 = vector.multi_reduction <add>, %3, %cst [2] : vector<8x8x128xf32> to vector<8x8xf32>
    %5 = vector.shape_cast %4 : vector<8x8xf32> to vector<8x8x1xf32>
    %cst_3 = arith.constant 1.280000e+02 : f32
    %6 = vector.broadcast %cst_3 : f32 to vector<8x8x1xf32>
    %7 = arith.divf %5, %6 : vector<8x8x1xf32>
    %8 = vector.broadcast %7 : vector<8x8x1xf32> to vector<8x8x128xf32>
    %9 = arith.subf %3, %8 : vector<8x8x128xf32>
    %10 = arith.mulf %9, %9 : vector<8x8x128xf32>
    %cst_4 = arith.constant dense<0.000000e+00> : vector<8x8xf32>
    %11 = vector.multi_reduction <add>, %10, %cst_4 [2] : vector<8x8x128xf32> to vector<8x8xf32>
    %12 = vector.shape_cast %11 : vector<8x8xf32> to vector<8x8x1xf32>
    %cst_5 = arith.constant 1.280000e+02 : f32
    %13 = vector.broadcast %cst_5 : f32 to vector<8x8x1xf32>
    %14 = arith.divf %12, %13 : vector<8x8x1xf32>
    %15 = vector.broadcast %7 : vector<8x8x1xf32> to vector<8x8x128xf32>
    %16 = arith.subf %3, %15 : vector<8x8x128xf32>
    %cst_6 = arith.constant 9.99999974E-6 : f32
    %17 = vector.broadcast %cst_6 : f32 to vector<8x8x1xf32>
    %18 = arith.addf %14, %17 : vector<8x8x1xf32>
    %19 = math.rsqrt %18 : vector<8x8x1xf32>
    %20 = vector.broadcast %19 : vector<8x8x1xf32> to vector<8x8x128xf32>
    %21 = arith.mulf %16, %20 : vector<8x8x128xf32>
    %c0_7 = arith.constant 0 : index
    %c0_8 = arith.constant 0 : index
    %c0_9 = arith.constant 0 : index
    %22 = vector.load %arg5[%c0_7, %c0_8, %c0_9] : memref<1x1x128xf32, #tpu.memory_space<vmem>>, vector<1x1x128xf32>
    %23 = vector.broadcast %22 : vector<1x1x128xf32> to vector<8x8x128xf32>
    %24 = arith.mulf %21, %23 : vector<8x8x128xf32>
    %c0_10 = arith.constant 0 : index
    %c0_11 = arith.constant 0 : index
    %c0_12 = arith.constant 0 : index
    %25 = vector.load %arg6[%c0_10, %c0_11, %c0_12] : memref<1x1x128xf32, #tpu.memory_space<vmem>>, vector<1x1x128xf32>
    %26 = vector.broadcast %25 : vector<1x1x128xf32> to vector<8x8x128xf32>
    %27 = arith.addf %24, %26 : vector<8x8x128xf32>
    %c0_13 = arith.constant 0 : index
    %c0_14 = arith.constant 0 : index
    %c0_15 = arith.constant 0 : index
    %28 = vector.load %arg2[%c0_13, %c0_14, %c0_15] : memref<2x128x128xbf16, #tpu.memory_space<vmem>>, vector<1x128x128xbf16>
    %29 = vector.shape_cast %28 : vector<1x128x128xbf16> to vector<128x128xbf16>
    %c0_16 = arith.constant 0 : index
    %c0_17 = arith.constant 0 : index
    %c0_18 = arith.constant 0 : index
    %30 = vector.load %arg3[%c0_16, %c0_17, %c0_18] : memref<2x128x128xbf16, #tpu.memory_space<vmem>>, vector<1x128x128xbf16>
    %31 = vector.shape_cast %30 : vector<1x128x128xbf16> to vector<128x128xbf16>
    %c0_19 = arith.constant 0 : index
    %c0_20 = arith.constant 0 : index
    %c0_21 = arith.constant 0 : index
    %32 = vector.load %arg4[%c0_19, %c0_20, %c0_21] : memref<2x1x128xf32, #tpu.memory_space<vmem>>, vector<1x1x128xf32>
    %33 = vector.shape_cast %32 : vector<1x1x128xf32> to vector<1x128xf32>
    %34 = vector.shape_cast %27 : vector<8x8x128xf32> to vector<64x128xf32>
    %35 = arith.truncf %34 : vector<64x128xf32> to vector<64x128xbf16>
    %cst_22 = arith.constant dense<0.000000e+00> : vector<64x128xf32>
    %36 = tpu.matmul %35, %29, %cst_22 {dimension_numbers = #tpu.dot_dimension_numbers<[1], [1], [0], [0], [0, 0, 1, 0], [], []>} : vector<64x128xbf16>, vector<128x128xbf16>, vector<64x128xf32> -> vector<64x128xf32>
    %37 = vector.broadcast %33 : vector<1x128xf32> to vector<64x128xf32>
    %38 = arith.addf %36, %37 : vector<64x128xf32>
    %39 = vector.shape_cast %38 : vector<64x128xf32> to vector<8x8x128xf32>
    %c0_23 = arith.constant 0 : index
    %c0_24 = arith.constant 0 : index
    %c0_25 = arith.constant 0 : index
    %40 = vector.load %arg7[%c0_23, %c0_24, %c0_25] : memref<8x8x128xf32, #tpu.memory_space<vmem>>, vector<8x8x128xf32>
    tpu.vector_store %arg7[%c0_23, %c0_24, %c0_25], %39 {strides = array<i32>} : memref<8x8x128xf32, #tpu.memory_space<vmem>>, vector<8x8x128xf32>,
    %c0_26 = arith.constant 0 : index
    %c0_27 = arith.constant 0 : index
    %c0_28 = arith.constant 0 : index
    %41 = vector.load %arg8[%c0_26, %c0_27, %c0_28] : memref<2x8x128xf32, #tpu.memory_space<vmem>>, vector<1x8x128xf32>
    %42 = vector.shape_cast %41 : vector<1x8x128xf32> to vector<8x128xf32>
    %c0_i32_29 = arith.constant 0 : i32
    %43 = arith.index_cast %c0_i32_29 : i32 to index
    %c0_30 = arith.constant 0 : index
    %c0_31 = arith.constant 0 : index
    %44 = vector.load %arg7[%43, %c0_30, %c0_31] : memref<8x8x128xf32, #tpu.memory_space<vmem>>, vector<1x8x128xf32>
    %45 = vector.shape_cast %44 : vector<1x8x128xf32> to vector<8x128xf32>
    %46 = arith.truncf %42 : vector<8x128xf32> to vector<8x128xbf16>
    %cst_32 = arith.constant dense<0.000000e+00> : vector<8x128xf32>
    %47 = tpu.matmul %46, %31, %cst_32 {dimension_numbers = #tpu.dot_dimension_numbers<[1], [1], [0], [0], [0, 0, 1, 0], [], []>} : vector<8x128xbf16>, vector<128x128xbf16>, vector<8x128xf32> -> vector<8x128xf32>
    %48 = arith.addf %45, %47 : vector<8x128xf32>
    %49 = math.tanh %48 : vector<8x128xf32>
    %50 = arith.index_cast %c0_i32_29 : i32 to index
    %c0_33 = arith.constant 0 : index
    %c0_34 = arith.constant 0 : index
    %51 = vector.load %arg7[%50, %c0_33, %c0_34] : memref<8x8x128xf32, #tpu.memory_space<vmem>>, vector<1x8x128xf32>
    %52 = vector.shape_cast %51 : vector<1x8x128xf32> to vector<8x128xf32>
    %53 = vector.shape_cast %49 : vector<8x128xf32> to vector<1x8x128xf32>
    tpu.vector_store %arg7[%50, %c0_33, %c0_34], %53 {strides = array<i32>} : memref<8x8x128xf32, #tpu.memory_space<vmem>>, vector<1x8x128xf32>,
    %c1_i32 = arith.constant 1 : i32
    %54 = arith.index_cast %c1_i32 : i32 to index
    %c0_35 = arith.constant 0 : index
    %c0_36 = arith.constant 0 : index
    %55 = vector.load %arg7[%54, %c0_35, %c0_36] : memref<8x8x128xf32, #tpu.memory_space<vmem>>, vector<1x8x128xf32>
    %56 = vector.shape_cast %55 : vector<1x8x128xf32> to vector<8x128xf32>
    %57 = arith.truncf %49 : vector<8x128xf32> to vector<8x128xbf16>
    %cst_37 = arith.constant dense<0.000000e+00> : vector<8x128xf32>
    %58 = tpu.matmul %57, %31, %cst_37 {dimension_numbers = #tpu.dot_dimension_numbers<[1], [1], [0], [0], [0, 0, 1, 0], [], []>} : vector<8x128xbf16>, vector<128x128xbf16>, vector<8x128xf32> -> vector<8x128xf32>
    %59 = arith.addf %56, %58 : vector<8x128xf32>
    %60 = math.tanh %59 : vector<8x128xf32>
    %61 = arith.index_cast %c1_i32 : i32 to index
    %c0_38 = arith.constant 0 : index
    %c0_39 = arith.constant 0 : index
    %62 = vector.load %arg7[%61, %c0_38, %c0_39] : memref<8x8x128xf32, #tpu.memory_space<vmem>>, vector<1x8x128xf32>
    %63 = vector.shape_cast %62 : vector<1x8x128xf32> to vector<8x128xf32>
    %64 = vector.shape_cast %60 : vector<8x128xf32> to vector<1x8x128xf32>
    tpu.vector_store %arg7[%61, %c0_38, %c0_39], %64 {strides = array<i32>} : memref<8x8x128xf32, #tpu.memory_space<vmem>>, vector<1x8x128xf32>,
    %c2_i32 = arith.constant 2 : i32
    %65 = arith.index_cast %c2_i32 : i32 to index
    %c0_40 = arith.constant 0 : index
    %c0_41 = arith.constant 0 : index
    %66 = vector.load %arg7[%65, %c0_40, %c0_41] : memref<8x8x128xf32, #tpu.memory_space<vmem>>, vector<1x8x128xf32>
    %67 = vector.shape_cast %66 : vector<1x8x128xf32> to vector<8x128xf32>
    %68 = arith.truncf %60 : vector<8x128xf32> to vector<8x128xbf16>
    %cst_42 = arith.constant dense<0.000000e+00> : vector<8x128xf32>
    %69 = tpu.matmul %68, %31, %cst_42 {dimension_numbers = #tpu.dot_dimension_numbers<[1], [1], [0], [0], [0, 0, 1, 0], [], []>} : vector<8x128xbf16>, vector<128x128xbf16>, vector<8x128xf32> -> vector<8x128xf32>
    %70 = arith.addf %67, %69 : vector<8x128xf32>
    %71 = math.tanh %70 : vector<8x128xf32>
    %72 = arith.index_cast %c2_i32 : i32 to index
    %c0_43 = arith.constant 0 : index
    %c0_44 = arith.constant 0 : index
    %73 = vector.load %arg7[%72, %c0_43, %c0_44] : memref<8x8x128xf32, #tpu.memory_space<vmem>>, vector<1x8x128xf32>
    %74 = vector.shape_cast %73 : vector<1x8x128xf32> to vector<8x128xf32>
    %75 = vector.shape_cast %71 : vector<8x128xf32> to vector<1x8x128xf32>
    tpu.vector_store %arg7[%72, %c0_43, %c0_44], %75 {strides = array<i32>} : memref<8x8x128xf32, #tpu.memory_space<vmem>>, vector<1x8x128xf32>,
    %c3_i32 = arith.constant 3 : i32
    %76 = arith.index_cast %c3_i32 : i32 to index
    %c0_45 = arith.constant 0 : index
    %c0_46 = arith.constant 0 : index
    %77 = vector.load %arg7[%76, %c0_45, %c0_46] : memref<8x8x128xf32, #tpu.memory_space<vmem>>, vector<1x8x128xf32>
    %78 = vector.shape_cast %77 : vector<1x8x128xf32> to vector<8x128xf32>
    %79 = arith.truncf %71 : vector<8x128xf32> to vector<8x128xbf16>
    %cst_47 = arith.constant dense<0.000000e+00> : vector<8x128xf32>
    %80 = tpu.matmul %79, %31, %cst_47 {dimension_numbers = #tpu.dot_dimension_numbers<[1], [1], [0], [0], [0, 0, 1, 0], [], []>} : vector<8x128xbf16>, vector<128x128xbf16>, vector<8x128xf32> -> vector<8x128xf32>
    %81 = arith.addf %78, %80 : vector<8x128xf32>
    %82 = math.tanh %81 : vector<8x128xf32>
    %83 = arith.index_cast %c3_i32 : i32 to index
    %c0_48 = arith.constant 0 : index
    %c0_49 = arith.constant 0 : index
    %84 = vector.load %arg7[%83, %c0_48, %c0_49] : memref<8x8x128xf32, #tpu.memory_space<vmem>>, vector<1x8x128xf32>
    %85 = vector.shape_cast %84 : vector<1x8x128xf32> to vector<8x128xf32>
    %86 = vector.shape_cast %82 : vector<8x128xf32> to vector<1x8x128xf32>
    tpu.vector_store %arg7[%83, %c0_48, %c0_49], %86 {strides = array<i32>} : memref<8x8x128xf32, #tpu.memory_space<vmem>>, vector<1x8x128xf32>,
    %c4_i32 = arith.constant 4 : i32
    %87 = arith.index_cast %c4_i32 : i32 to index
    %c0_50 = arith.constant 0 : index
    %c0_51 = arith.constant 0 : index
    %88 = vector.load %arg7[%87, %c0_50, %c0_51] : memref<8x8x128xf32, #tpu.memory_space<vmem>>, vector<1x8x128xf32>
    %89 = vector.shape_cast %88 : vector<1x8x128xf32> to vector<8x128xf32>
    %90 = arith.truncf %82 : vector<8x128xf32> to vector<8x128xbf16>
    %cst_52 = arith.constant dense<0.000000e+00> : vector<8x128xf32>
    %91 = tpu.matmul %90, %31, %cst_52 {dimension_numbers = #tpu.dot_dimension_numbers<[1], [1], [0], [0], [0, 0, 1, 0], [], []>} : vector<8x128xbf16>, vector<128x128xbf16>, vector<8x128xf32> -> vector<8x128xf32>
    %92 = arith.addf %89, %91 : vector<8x128xf32>
    %93 = math.tanh %92 : vector<8x128xf32>
    %94 = arith.index_cast %c4_i32 : i32 to index
    %c0_53 = arith.constant 0 : index
    %c0_54 = arith.constant 0 : index
    %95 = vector.load %arg7[%94, %c0_53, %c0_54] : memref<8x8x128xf32, #tpu.memory_space<vmem>>, vector<1x8x128xf32>
    %96 = vector.shape_cast %95 : vector<1x8x128xf32> to vector<8x128xf32>
    %97 = vector.shape_cast %93 : vector<8x128xf32> to vector<1x8x128xf32>
    tpu.vector_store %arg7[%94, %c0_53, %c0_54], %97 {strides = array<i32>} : memref<8x8x128xf32, #tpu.memory_space<vmem>>, vector<1x8x128xf32>,
    %c5_i32 = arith.constant 5 : i32
    %98 = arith.index_cast %c5_i32 : i32 to index
    %c0_55 = arith.constant 0 : index
    %c0_56 = arith.constant 0 : index
    %99 = vector.load %arg7[%98, %c0_55, %c0_56] : memref<8x8x128xf32, #tpu.memory_space<vmem>>, vector<1x8x128xf32>
    %100 = vector.shape_cast %99 : vector<1x8x128xf32> to vector<8x128xf32>
    %101 = arith.truncf %93 : vector<8x128xf32> to vector<8x128xbf16>
    %cst_57 = arith.constant dense<0.000000e+00> : vector<8x128xf32>
    %102 = tpu.matmul %101, %31, %cst_57 {dimension_numbers = #tpu.dot_dimension_numbers<[1], [1], [0], [0], [0, 0, 1, 0], [], []>} : vector<8x128xbf16>, vector<128x128xbf16>, vector<8x128xf32> -> vector<8x128xf32>
    %103 = arith.addf %100, %102 : vector<8x128xf32>
    %104 = math.tanh %103 : vector<8x128xf32>
    %105 = arith.index_cast %c5_i32 : i32 to index
    %c0_58 = arith.constant 0 : index
    %c0_59 = arith.constant 0 : index
    %106 = vector.load %arg7[%105, %c0_58, %c0_59] : memref<8x8x128xf32, #tpu.memory_space<vmem>>, vector<1x8x128xf32>
    %107 = vector.shape_cast %106 : vector<1x8x128xf32> to vector<8x128xf32>
    %108 = vector.shape_cast %104 : vector<8x128xf32> to vector<1x8x128xf32>
    tpu.vector_store %arg7[%105, %c0_58, %c0_59], %108 {strides = array<i32>} : memref<8x8x128xf32, #tpu.memory_space<vmem>>, vector<1x8x128xf32>,
    %c6_i32 = arith.constant 6 : i32
    %109 = arith.index_cast %c6_i32 : i32 to index
    %c0_60 = arith.constant 0 : index
    %c0_61 = arith.constant 0 : index
    %110 = vector.load %arg7[%109, %c0_60, %c0_61] : memref<8x8x128xf32, #tpu.memory_space<vmem>>, vector<1x8x128xf32>
    %111 = vector.shape_cast %110 : vector<1x8x128xf32> to vector<8x128xf32>
    %112 = arith.truncf %104 : vector<8x128xf32> to vector<8x128xbf16>
    %cst_62 = arith.constant dense<0.000000e+00> : vector<8x128xf32>
    %113 = tpu.matmul %112, %31, %cst_62 {dimension_numbers = #tpu.dot_dimension_numbers<[1], [1], [0], [0], [0, 0, 1, 0], [], []>} : vector<8x128xbf16>, vector<128x128xbf16>, vector<8x128xf32> -> vector<8x128xf32>
    %114 = arith.addf %111, %113 : vector<8x128xf32>
    %115 = math.tanh %114 : vector<8x128xf32>
    %116 = arith.index_cast %c6_i32 : i32 to index
    %c0_63 = arith.constant 0 : index
    %c0_64 = arith.constant 0 : index
    %117 = vector.load %arg7[%116, %c0_63, %c0_64] : memref<8x8x128xf32, #tpu.memory_space<vmem>>, vector<1x8x128xf32>
    %118 = vector.shape_cast %117 : vector<1x8x128xf32> to vector<8x128xf32>
    %119 = vector.shape_cast %115 : vector<8x128xf32> to vector<1x8x128xf32>
    tpu.vector_store %arg7[%116, %c0_63, %c0_64], %119 {strides = array<i32>} : memref<8x8x128xf32, #tpu.memory_space<vmem>>, vector<1x8x128xf32>,
    %c7_i32 = arith.constant 7 : i32
    %120 = arith.index_cast %c7_i32 : i32 to index
    %c0_65 = arith.constant 0 : index
    %c0_66 = arith.constant 0 : index
    %121 = vector.load %arg7[%120, %c0_65, %c0_66] : memref<8x8x128xf32, #tpu.memory_space<vmem>>, vector<1x8x128xf32>
    %122 = vector.shape_cast %121 : vector<1x8x128xf32> to vector<8x128xf32>
    %123 = arith.truncf %115 : vector<8x128xf32> to vector<8x128xbf16>
    %cst_67 = arith.constant dense<0.000000e+00> : vector<8x128xf32>
    %124 = tpu.matmul %123, %31, %cst_67 {dimension_numbers = #tpu.dot_dimension_numbers<[1], [1], [0], [0], [0, 0, 1, 0], [], []>} : vector<8x128xbf16>, vector<128x128xbf16>, vector<8x128xf32> -> vector<8x128xf32>
    %125 = arith.addf %122, %124 : vector<8x128xf32>
    %126 = math.tanh %125 : vector<8x128xf32>
    %127 = arith.index_cast %c7_i32 : i32 to index
    %c0_68 = arith.constant 0 : index
    %c0_69 = arith.constant 0 : index
    %128 = vector.load %arg7[%127, %c0_68, %c0_69] : memref<8x8x128xf32, #tpu.memory_space<vmem>>, vector<1x8x128xf32>
    %129 = vector.shape_cast %128 : vector<1x8x128xf32> to vector<8x128xf32>
    %130 = vector.shape_cast %126 : vector<8x128xf32> to vector<1x8x128xf32>
    tpu.vector_store %arg7[%127, %c0_68, %c0_69], %130 {strides = array<i32>} : memref<8x8x128xf32, #tpu.memory_space<vmem>>, vector<1x8x128xf32>,
    %c8_i32 = arith.constant 8 : i32
    %c0_70 = arith.constant 0 : index
    %c0_71 = arith.constant 0 : index
    %c0_72 = arith.constant 0 : index
    %131 = vector.load %arg8[%c0_70, %c0_71, %c0_72] : memref<2x8x128xf32, #tpu.memory_space<vmem>>, vector<1x8x128xf32>
    %132 = vector.shape_cast %131 : vector<1x8x128xf32> to vector<8x128xf32>
    %133 = vector.shape_cast %126 : vector<8x128xf32> to vector<1x8x128xf32>
    tpu.vector_store %arg8[%c0_70, %c0_71, %c0_72], %133 {strides = array<i32>} : memref<2x8x128xf32, #tpu.memory_space<vmem>>, vector<1x8x128xf32>,
    %c1 = arith.constant 1 : index
    %c0_73 = arith.constant 0 : index
    %c0_74 = arith.constant 0 : index
    %134 = vector.load %arg2[%c1, %c0_73, %c0_74] : memref<2x128x128xbf16, #tpu.memory_space<vmem>>, vector<1x128x128xbf16>
    %135 = vector.shape_cast %134 : vector<1x128x128xbf16> to vector<128x128xbf16>
    %c1_75 = arith.constant 1 : index
    %c0_76 = arith.constant 0 : index
    %c0_77 = arith.constant 0 : index
    %136 = vector.load %arg3[%c1_75, %c0_76, %c0_77] : memref<2x128x128xbf16, #tpu.memory_space<vmem>>, vector<1x128x128xbf16>
    %137 = vector.shape_cast %136 : vector<1x128x128xbf16> to vector<128x128xbf16>
    %c1_78 = arith.constant 1 : index
    %c0_79 = arith.constant 0 : index
    %c0_80 = arith.constant 0 : index
    %138 = vector.load %arg4[%c1_78, %c0_79, %c0_80] : memref<2x1x128xf32, #tpu.memory_space<vmem>>, vector<1x1x128xf32>
    %139 = vector.shape_cast %138 : vector<1x1x128xf32> to vector<1x128xf32>
    %c0_81 = arith.constant 0 : index
    %c0_82 = arith.constant 0 : index
    %c0_83 = arith.constant 0 : index
    %140 = vector.load %arg7[%c0_81, %c0_82, %c0_83] : memref<8x8x128xf32, #tpu.memory_space<vmem>>, vector<8x8x128xf32>
    %141 = vector.shape_cast %140 : vector<8x8x128xf32> to vector<64x128xf32>
    %142 = arith.truncf %141 : vector<64x128xf32> to vector<64x128xbf16>
    %cst_84 = arith.constant dense<0.000000e+00> : vector<64x128xf32>
    %143 = tpu.matmul %142, %135, %cst_84 {dimension_numbers = #tpu.dot_dimension_numbers<[1], [1], [0], [0], [0, 0, 1, 0], [], []>} : vector<64x128xbf16>, vector<128x128xbf16>, vector<64x128xf32> -> vector<64x128xf32>
    %144 = vector.broadcast %139 : vector<1x128xf32> to vector<64x128xf32>
    %145 = arith.addf %143, %144 : vector<64x128xf32>
    %146 = vector.shape_cast %145 : vector<64x128xf32> to vector<8x8x128xf32>
    %c0_85 = arith.constant 0 : index
    %c0_86 = arith.constant 0 : index
    %c0_87 = arith.constant 0 : index
    %147 = vector.load %arg7[%c0_85, %c0_86, %c0_87] : memref<8x8x128xf32, #tpu.memory_space<vmem>>, vector<8x8x128xf32>
    tpu.vector_store %arg7[%c0_85, %c0_86, %c0_87], %146 {strides = array<i32>} : memref<8x8x128xf32, #tpu.memory_space<vmem>>, vector<8x8x128xf32>,
    %c1_88 = arith.constant 1 : index
    %c0_89 = arith.constant 0 : index
    %c0_90 = arith.constant 0 : index
    %148 = vector.load %arg8[%c1_88, %c0_89, %c0_90] : memref<2x8x128xf32, #tpu.memory_space<vmem>>, vector<1x8x128xf32>
    %149 = vector.shape_cast %148 : vector<1x8x128xf32> to vector<8x128xf32>
    %c0_i32_91 = arith.constant 0 : i32
    %150 = arith.index_cast %c0_i32_91 : i32 to index
    %c0_92 = arith.constant 0 : index
    %c0_93 = arith.constant 0 : index
    %151 = vector.load %arg7[%150, %c0_92, %c0_93] : memref<8x8x128xf32, #tpu.memory_space<vmem>>, vector<1x8x128xf32>
    %152 = vector.shape_cast %151 : vector<1x8x128xf32> to vector<8x128xf32>
    %153 = arith.truncf %149 : vector<8x128xf32> to vector<8x128xbf16>
    %cst_94 = arith.constant dense<0.000000e+00> : vector<8x128xf32>
    %154 = tpu.matmul %153, %137, %cst_94 {dimension_numbers = #tpu.dot_dimension_numbers<[1], [1], [0], [0], [0, 0, 1, 0], [], []>} : vector<8x128xbf16>, vector<128x128xbf16>, vector<8x128xf32> -> vector<8x128xf32>
    %155 = arith.addf %152, %154 : vector<8x128xf32>
    %156 = math.tanh %155 : vector<8x128xf32>
    %157 = arith.index_cast %c0_i32_91 : i32 to index
    %c0_95 = arith.constant 0 : index
    %c0_96 = arith.constant 0 : index
    %158 = vector.load %arg7[%157, %c0_95, %c0_96] : memref<8x8x128xf32, #tpu.memory_space<vmem>>, vector<1x8x128xf32>
    %159 = vector.shape_cast %158 : vector<1x8x128xf32> to vector<8x128xf32>
    %160 = vector.shape_cast %156 : vector<8x128xf32> to vector<1x8x128xf32>
    tpu.vector_store %arg7[%157, %c0_95, %c0_96], %160 {strides = array<i32>} : memref<8x8x128xf32, #tpu.memory_space<vmem>>, vector<1x8x128xf32>,
    %c1_i32_97 = arith.constant 1 : i32
    %161 = arith.index_cast %c1_i32_97 : i32 to index
    %c0_98 = arith.constant 0 : index
    %c0_99 = arith.constant 0 : index
    %162 = vector.load %arg7[%161, %c0_98, %c0_99] : memref<8x8x128xf32, #tpu.memory_space<vmem>>, vector<1x8x128xf32>
    %163 = vector.shape_cast %162 : vector<1x8x128xf32> to vector<8x128xf32>
    %164 = arith.truncf %156 : vector<8x128xf32> to vector<8x128xbf16>
    %cst_100 = arith.constant dense<0.000000e+00> : vector<8x128xf32>
    %165 = tpu.matmul %164, %137, %cst_100 {dimension_numbers = #tpu.dot_dimension_numbers<[1], [1], [0], [0], [0, 0, 1, 0], [], []>} : vector<8x128xbf16>, vector<128x128xbf16>, vector<8x128xf32> -> vector<8x128xf32>
    %166 = arith.addf %163, %165 : vector<8x128xf32>
    %167 = math.tanh %166 : vector<8x128xf32>
    %168 = arith.index_cast %c1_i32_97 : i32 to index
    %c0_101 = arith.constant 0 : index
    %c0_102 = arith.constant 0 : index
    %169 = vector.load %arg7[%168, %c0_101, %c0_102] : memref<8x8x128xf32, #tpu.memory_space<vmem>>, vector<1x8x128xf32>
    %170 = vector.shape_cast %169 : vector<1x8x128xf32> to vector<8x128xf32>
    %171 = vector.shape_cast %167 : vector<8x128xf32> to vector<1x8x128xf32>
    tpu.vector_store %arg7[%168, %c0_101, %c0_102], %171 {strides = array<i32>} : memref<8x8x128xf32, #tpu.memory_space<vmem>>, vector<1x8x128xf32>,
    %c2_i32_103 = arith.constant 2 : i32
    %172 = arith.index_cast %c2_i32_103 : i32 to index
    %c0_104 = arith.constant 0 : index
    %c0_105 = arith.constant 0 : index
    %173 = vector.load %arg7[%172, %c0_104, %c0_105] : memref<8x8x128xf32, #tpu.memory_space<vmem>>, vector<1x8x128xf32>
    %174 = vector.shape_cast %173 : vector<1x8x128xf32> to vector<8x128xf32>
    %175 = arith.truncf %167 : vector<8x128xf32> to vector<8x128xbf16>
    %cst_106 = arith.constant dense<0.000000e+00> : vector<8x128xf32>
    %176 = tpu.matmul %175, %137, %cst_106 {dimension_numbers = #tpu.dot_dimension_numbers<[1], [1], [0], [0], [0, 0, 1, 0], [], []>} : vector<8x128xbf16>, vector<128x128xbf16>, vector<8x128xf32> -> vector<8x128xf32>
    %177 = arith.addf %174, %176 : vector<8x128xf32>
    %178 = math.tanh %177 : vector<8x128xf32>
    %179 = arith.index_cast %c2_i32_103 : i32 to index
    %c0_107 = arith.constant 0 : index
    %c0_108 = arith.constant 0 : index
    %180 = vector.load %arg7[%179, %c0_107, %c0_108] : memref<8x8x128xf32, #tpu.memory_space<vmem>>, vector<1x8x128xf32>
    %181 = vector.shape_cast %180 : vector<1x8x128xf32> to vector<8x128xf32>
    %182 = vector.shape_cast %178 : vector<8x128xf32> to vector<1x8x128xf32>
    tpu.vector_store %arg7[%179, %c0_107, %c0_108], %182 {strides = array<i32>} : memref<8x8x128xf32, #tpu.memory_space<vmem>>, vector<1x8x128xf32>,
    %c3_i32_109 = arith.constant 3 : i32
    %183 = arith.index_cast %c3_i32_109 : i32 to index
    %c0_110 = arith.constant 0 : index
    %c0_111 = arith.constant 0 : index
    %184 = vector.load %arg7[%183, %c0_110, %c0_111] : memref<8x8x128xf32, #tpu.memory_space<vmem>>, vector<1x8x128xf32>
    %185 = vector.shape_cast %184 : vector<1x8x128xf32> to vector<8x128xf32>
    %186 = arith.truncf %178 : vector<8x128xf32> to vector<8x128xbf16>
    %cst_112 = arith.constant dense<0.000000e+00> : vector<8x128xf32>
    %187 = tpu.matmul %186, %137, %cst_112 {dimension_numbers = #tpu.dot_dimension_numbers<[1], [1], [0], [0], [0, 0, 1, 0], [], []>} : vector<8x128xbf16>, vector<128x128xbf16>, vector<8x128xf32> -> vector<8x128xf32>
    %188 = arith.addf %185, %187 : vector<8x128xf32>
    %189 = math.tanh %188 : vector<8x128xf32>
    %190 = arith.index_cast %c3_i32_109 : i32 to index
    %c0_113 = arith.constant 0 : index
    %c0_114 = arith.constant 0 : index
    %191 = vector.load %arg7[%190, %c0_113, %c0_114] : memref<8x8x128xf32, #tpu.memory_space<vmem>>, vector<1x8x128xf32>
    %192 = vector.shape_cast %191 : vector<1x8x128xf32> to vector<8x128xf32>
    %193 = vector.shape_cast %189 : vector<8x128xf32> to vector<1x8x128xf32>
    tpu.vector_store %arg7[%190, %c0_113, %c0_114], %193 {strides = array<i32>} : memref<8x8x128xf32, #tpu.memory_space<vmem>>, vector<1x8x128xf32>,
    %c4_i32_115 = arith.constant 4 : i32
    %194 = arith.index_cast %c4_i32_115 : i32 to index
    %c0_116 = arith.constant 0 : index
    %c0_117 = arith.constant 0 : index
    %195 = vector.load %arg7[%194, %c0_116, %c0_117] : memref<8x8x128xf32, #tpu.memory_space<vmem>>, vector<1x8x128xf32>
    %196 = vector.shape_cast %195 : vector<1x8x128xf32> to vector<8x128xf32>
    %197 = arith.truncf %189 : vector<8x128xf32> to vector<8x128xbf16>
    %cst_118 = arith.constant dense<0.000000e+00> : vector<8x128xf32>
    %198 = tpu.matmul %197, %137, %cst_118 {dimension_numbers = #tpu.dot_dimension_numbers<[1], [1], [0], [0], [0, 0, 1, 0], [], []>} : vector<8x128xbf16>, vector<128x128xbf16>, vector<8x128xf32> -> vector<8x128xf32>
    %199 = arith.addf %196, %198 : vector<8x128xf32>
    %200 = math.tanh %199 : vector<8x128xf32>
    %201 = arith.index_cast %c4_i32_115 : i32 to index
    %c0_119 = arith.constant 0 : index
    %c0_120 = arith.constant 0 : index
    %202 = vector.load %arg7[%201, %c0_119, %c0_120] : memref<8x8x128xf32, #tpu.memory_space<vmem>>, vector<1x8x128xf32>
    %203 = vector.shape_cast %202 : vector<1x8x128xf32> to vector<8x128xf32>
    %204 = vector.shape_cast %200 : vector<8x128xf32> to vector<1x8x128xf32>
    tpu.vector_store %arg7[%201, %c0_119, %c0_120], %204 {strides = array<i32>} : memref<8x8x128xf32, #tpu.memory_space<vmem>>, vector<1x8x128xf32>,
    %c5_i32_121 = arith.constant 5 : i32
    %205 = arith.index_cast %c5_i32_121 : i32 to index
    %c0_122 = arith.constant 0 : index
    %c0_123 = arith.constant 0 : index
    %206 = vector.load %arg7[%205, %c0_122, %c0_123] : memref<8x8x128xf32, #tpu.memory_space<vmem>>, vector<1x8x128xf32>
    %207 = vector.shape_cast %206 : vector<1x8x128xf32> to vector<8x128xf32>
    %208 = arith.truncf %200 : vector<8x128xf32> to vector<8x128xbf16>
    %cst_124 = arith.constant dense<0.000000e+00> : vector<8x128xf32>
    %209 = tpu.matmul %208, %137, %cst_124 {dimension_numbers = #tpu.dot_dimension_numbers<[1], [1], [0], [0], [0, 0, 1, 0], [], []>} : vector<8x128xbf16>, vector<128x128xbf16>, vector<8x128xf32> -> vector<8x128xf32>
    %210 = arith.addf %207, %209 : vector<8x128xf32>
    %211 = math.tanh %210 : vector<8x128xf32>
    %212 = arith.index_cast %c5_i32_121 : i32 to index
    %c0_125 = arith.constant 0 : index
    %c0_126 = arith.constant 0 : index
    %213 = vector.load %arg7[%212, %c0_125, %c0_126] : memref<8x8x128xf32, #tpu.memory_space<vmem>>, vector<1x8x128xf32>
    %214 = vector.shape_cast %213 : vector<1x8x128xf32> to vector<8x128xf32>
    %215 = vector.shape_cast %211 : vector<8x128xf32> to vector<1x8x128xf32>
    tpu.vector_store %arg7[%212, %c0_125, %c0_126], %215 {strides = array<i32>} : memref<8x8x128xf32, #tpu.memory_space<vmem>>, vector<1x8x128xf32>,
    %c6_i32_127 = arith.constant 6 : i32
    %216 = arith.index_cast %c6_i32_127 : i32 to index
    %c0_128 = arith.constant 0 : index
    %c0_129 = arith.constant 0 : index
    %217 = vector.load %arg7[%216, %c0_128, %c0_129] : memref<8x8x128xf32, #tpu.memory_space<vmem>>, vector<1x8x128xf32>
    %218 = vector.shape_cast %217 : vector<1x8x128xf32> to vector<8x128xf32>
    %219 = arith.truncf %211 : vector<8x128xf32> to vector<8x128xbf16>
    %cst_130 = arith.constant dense<0.000000e+00> : vector<8x128xf32>
    %220 = tpu.matmul %219, %137, %cst_130 {dimension_numbers = #tpu.dot_dimension_numbers<[1], [1], [0], [0], [0, 0, 1, 0], [], []>} : vector<8x128xbf16>, vector<128x128xbf16>, vector<8x128xf32> -> vector<8x128xf32>
    %221 = arith.addf %218, %220 : vector<8x128xf32>
    %222 = math.tanh %221 : vector<8x128xf32>
    %223 = arith.index_cast %c6_i32_127 : i32 to index
    %c0_131 = arith.constant 0 : index
    %c0_132 = arith.constant 0 : index
    %224 = vector.load %arg7[%223, %c0_131, %c0_132] : memref<8x8x128xf32, #tpu.memory_space<vmem>>, vector<1x8x128xf32>
    %225 = vector.shape_cast %224 : vector<1x8x128xf32> to vector<8x128xf32>
    %226 = vector.shape_cast %222 : vector<8x128xf32> to vector<1x8x128xf32>
    tpu.vector_store %arg7[%223, %c0_131, %c0_132], %226 {strides = array<i32>} : memref<8x8x128xf32, #tpu.memory_space<vmem>>, vector<1x8x128xf32>,
    %c7_i32_133 = arith.constant 7 : i32
    %227 = arith.index_cast %c7_i32_133 : i32 to index
    %c0_134 = arith.constant 0 : index
    %c0_135 = arith.constant 0 : index
    %228 = vector.load %arg7[%227, %c0_134, %c0_135] : memref<8x8x128xf32, #tpu.memory_space<vmem>>, vector<1x8x128xf32>
    %229 = vector.shape_cast %228 : vector<1x8x128xf32> to vector<8x128xf32>
    %230 = arith.truncf %222 : vector<8x128xf32> to vector<8x128xbf16>
    %cst_136 = arith.constant dense<0.000000e+00> : vector<8x128xf32>
    %231 = tpu.matmul %230, %137, %cst_136 {dimension_numbers = #tpu.dot_dimension_numbers<[1], [1], [0], [0], [0, 0, 1, 0], [], []>} : vector<8x128xbf16>, vector<128x128xbf16>, vector<8x128xf32> -> vector<8x128xf32>
    %232 = arith.addf %229, %231 : vector<8x128xf32>
    %233 = math.tanh %232 : vector<8x128xf32>
    %234 = arith.index_cast %c7_i32_133 : i32 to index
    %c0_137 = arith.constant 0 : index
    %c0_138 = arith.constant 0 : index
    %235 = vector.load %arg7[%234, %c0_137, %c0_138] : memref<8x8x128xf32, #tpu.memory_space<vmem>>, vector<1x8x128xf32>
    %236 = vector.shape_cast %235 : vector<1x8x128xf32> to vector<8x128xf32>
    %237 = vector.shape_cast %233 : vector<8x128xf32> to vector<1x8x128xf32>
    tpu.vector_store %arg7[%234, %c0_137, %c0_138], %237 {strides = array<i32>} : memref<8x8x128xf32, #tpu.memory_space<vmem>>, vector<1x8x128xf32>,
    %c8_i32_139 = arith.constant 8 : i32
    %c1_140 = arith.constant 1 : index
    %c0_141 = arith.constant 0 : index
    %c0_142 = arith.constant 0 : index
    %238 = vector.load %arg8[%c1_140, %c0_141, %c0_142] : memref<2x8x128xf32, #tpu.memory_space<vmem>>, vector<1x8x128xf32>
    %239 = vector.shape_cast %238 : vector<1x8x128xf32> to vector<8x128xf32>
    %240 = vector.shape_cast %233 : vector<8x128xf32> to vector<1x8x128xf32>
    tpu.vector_store %arg8[%c1_140, %c0_141, %c0_142], %240 {strides = array<i32>} : memref<2x8x128xf32, #tpu.memory_space<vmem>>, vector<1x8x128xf32>,
    return
  }
  func.func @transform_0(%arg0: i32) -> (i32, i32, i32) {
    %c0_i32 = arith.constant 0 : i32
    %c0_i32_0 = arith.constant 0 : i32
    %c0_i32_1 = arith.constant 0 : i32
    return %arg0, %c0_i32, %c0_i32_0 : i32, i32, i32
  }
  func.func @transform_1(%arg0: i32) -> (i32, i32, i32) {
    %c0_i32 = arith.constant 0 : i32
    %c0_i32_0 = arith.constant 0 : i32
    %c0_i32_1 = arith.constant 0 : i32
    %c0_i32_2 = arith.constant 0 : i32
    return %c0_i32, %c0_i32_0, %c0_i32_1 : i32, i32, i32
  }
  func.func @transform_2(%arg0: i32) -> (i32, i32, i32) {
    %c0_i32 = arith.constant 0 : i32
    %c0_i32_0 = arith.constant 0 : i32
    %c0_i32_1 = arith.constant 0 : i32
    %c0_i32_2 = arith.constant 0 : i32
    return %c0_i32, %c0_i32_0, %c0_i32_1 : i32, i32, i32
  }
  func.func @transform_3(%arg0: i32) -> (i32, i32, i32) {
    %c0_i32 = arith.constant 0 : i32
    %c0_i32_0 = arith.constant 0 : i32
    %c0_i32_1 = arith.constant 0 : i32
    %c0_i32_2 = arith.constant 0 : i32
    return %c0_i32, %c0_i32_0, %c0_i32_1 : i32, i32, i32
  }
  func.func @transform_4(%arg0: i32) -> (i32, i32, i32) {
    %c0_i32 = arith.constant 0 : i32
    %c0_i32_0 = arith.constant 0 : i32
    %c0_i32_1 = arith.constant 0 : i32
    %c0_i32_2 = arith.constant 0 : i32
    return %c0_i32, %c0_i32_0, %c0_i32_1 : i32, i32, i32
  }
  func.func @transform_5(%arg0: i32) -> (i32, i32, i32) {
    %c0_i32 = arith.constant 0 : i32
    %c0_i32_0 = arith.constant 0 : i32
    %c0_i32_1 = arith.constant 0 : i32
    %c0_i32_2 = arith.constant 0 : i32
    return %c0_i32, %c0_i32_0, %c0_i32_1 : i32, i32, i32
  }
  func.func @transform_6(%arg0: i32) -> (i32, i32, i32) {
    %c0_i32 = arith.constant 0 : i32
    %c0_i32_0 = arith.constant 0 : i32
    %c0_i32_1 = arith.constant 0 : i32
    return %arg0, %c0_i32, %c0_i32_0 : i32, i32, i32
  }
}

module attributes {stable_mosaic.version = 11 : i64} {
  func.func @_fc_postnorm_kernel(%arg0: i32, %arg1: i32, %arg2: memref<32x128xf32, #tpu.memory_space<vmem>>, %arg3: memref<1x128xf32, #tpu.memory_space<vmem>>, %arg4: memref<1x128xf32, #tpu.memory_space<vmem>>, %arg5: memref<256x128xbf16, #tpu.memory_space<vmem>>, %arg6: memref<1x256xf32, #tpu.memory_space<vmem>>, %arg7: memref<32x256xf32, #tpu.memory_space<vmem>>) attributes {dimension_semantics = [#tpu.dimension_semantics<parallel>, #tpu.dimension_semantics<parallel>], iteration_bounds = array<i64: 1, 2>, scalar_prefetch = 0 : i64, scratch_operands = 0 : i64, tpu.core_type = #tpu.core_type<tc>, window_params = [{transform_indices = @transform_0, window_bounds = array<i64: 32, 128>}, {pipeline_mode = #tpu.pipeline_mode<synchronous>, transform_indices = @transform_1, window_bounds = array<i64: 1, 128>}, {pipeline_mode = #tpu.pipeline_mode<synchronous>, transform_indices = @transform_2, window_bounds = array<i64: 1, 128>}, {transform_indices = @transform_3, window_bounds = array<i64: 256, 128>}, {transform_indices = @transform_4, window_bounds = array<i64: 1, 256>}, {transform_indices = @transform_5, window_bounds = array<i64: 32, 256>}]} {
    %c0 = arith.constant 0 : index
    %c0_0 = arith.constant 0 : index
    %0 = vector.load %arg2[%c0, %c0_0] : memref<32x128xf32, #tpu.memory_space<vmem>>, vector<32x128xf32>
    %cst = arith.constant dense<0.000000e+00> : vector<32xf32>
    %1 = vector.multi_reduction <add>, %0, %cst [1] : vector<32x128xf32> to vector<32xf32>
    %2 = vector.shape_cast %1 : vector<32xf32> to vector<32x1xf32>
    %cst_1 = arith.constant 1.280000e+02 : f32
    %3 = vector.broadcast %cst_1 : f32 to vector<32x1xf32>
    %4 = arith.divf %2, %3 : vector<32x1xf32>
    %5 = vector.broadcast %4 : vector<32x1xf32> to vector<32x128xf32>
    %6 = arith.subf %0, %5 : vector<32x128xf32>
    %7 = arith.mulf %6, %6 : vector<32x128xf32>
    %cst_2 = arith.constant dense<0.000000e+00> : vector<32xf32>
    %8 = vector.multi_reduction <add>, %7, %cst_2 [1] : vector<32x128xf32> to vector<32xf32>
    %9 = vector.shape_cast %8 : vector<32xf32> to vector<32x1xf32>
    %cst_3 = arith.constant 1.280000e+02 : f32
    %10 = vector.broadcast %cst_3 : f32 to vector<32x1xf32>
    %11 = arith.divf %9, %10 : vector<32x1xf32>
    %12 = vector.broadcast %4 : vector<32x1xf32> to vector<32x128xf32>
    %13 = arith.subf %0, %12 : vector<32x128xf32>
    %cst_4 = arith.constant 9.99999974E-6 : f32
    %14 = vector.broadcast %cst_4 : f32 to vector<32x1xf32>
    %15 = arith.addf %11, %14 : vector<32x1xf32>
    %16 = math.rsqrt %15 : vector<32x1xf32>
    %17 = vector.broadcast %16 : vector<32x1xf32> to vector<32x128xf32>
    %18 = arith.mulf %13, %17 : vector<32x128xf32>
    %c0_5 = arith.constant 0 : index
    %c0_6 = arith.constant 0 : index
    %19 = vector.load %arg3[%c0_5, %c0_6] : memref<1x128xf32, #tpu.memory_space<vmem>>, vector<1x128xf32>
    %20 = vector.broadcast %19 : vector<1x128xf32> to vector<32x128xf32>
    %21 = arith.mulf %18, %20 : vector<32x128xf32>
    %c0_7 = arith.constant 0 : index
    %c0_8 = arith.constant 0 : index
    %22 = vector.load %arg4[%c0_7, %c0_8] : memref<1x128xf32, #tpu.memory_space<vmem>>, vector<1x128xf32>
    %23 = vector.broadcast %22 : vector<1x128xf32> to vector<32x128xf32>
    %24 = arith.addf %21, %23 : vector<32x128xf32>
    %25 = arith.truncf %24 : vector<32x128xf32> to vector<32x128xbf16>
    %c0_9 = arith.constant 0 : index
    %c0_10 = arith.constant 0 : index
    %26 = vector.load %arg5[%c0_9, %c0_10] : memref<256x128xbf16, #tpu.memory_space<vmem>>, vector<256x128xbf16>
    %cst_11 = arith.constant dense<0.000000e+00> : vector<32x256xf32>
    %27 = tpu.matmul %25, %26, %cst_11 {dimension_numbers = #tpu.dot_dimension_numbers<[1], [1], [0], [0], [0, 0, 1, 0], [], []>} : vector<32x128xbf16>, vector<256x128xbf16>, vector<32x256xf32> -> vector<32x256xf32>
    %c0_12 = arith.constant 0 : index
    %c0_13 = arith.constant 0 : index
    %28 = vector.load %arg6[%c0_12, %c0_13] : memref<1x256xf32, #tpu.memory_space<vmem>>, vector<1x256xf32>
    %29 = vector.broadcast %28 : vector<1x256xf32> to vector<32x256xf32>
    %30 = arith.addf %27, %29 : vector<32x256xf32>
    %c0_14 = arith.constant 0 : index
    %c0_15 = arith.constant 0 : index
    %31 = vector.load %arg7[%c0_14, %c0_15] : memref<32x256xf32, #tpu.memory_space<vmem>>, vector<32x256xf32>
    tpu.vector_store %arg7[%c0_14, %c0_15], %30 {strides = array<i32>} : memref<32x256xf32, #tpu.memory_space<vmem>>, vector<32x256xf32>,
    return
  }
  func.func @transform_0(%arg0: i32, %arg1: i32) -> (i32, i32) {
    %c0_i32 = arith.constant 0 : i32
    %c0_i32_0 = arith.constant 0 : i32
    return %arg0, %c0_i32 : i32, i32
  }
  func.func @transform_1(%arg0: i32, %arg1: i32) -> (i32, i32) {
    %c0_i32 = arith.constant 0 : i32
    %c0_i32_0 = arith.constant 0 : i32
    %c0_i32_1 = arith.constant 0 : i32
    return %c0_i32, %c0_i32_0 : i32, i32
  }
  func.func @transform_2(%arg0: i32, %arg1: i32) -> (i32, i32) {
    %c0_i32 = arith.constant 0 : i32
    %c0_i32_0 = arith.constant 0 : i32
    %c0_i32_1 = arith.constant 0 : i32
    return %c0_i32, %c0_i32_0 : i32, i32
  }
  func.func @transform_3(%arg0: i32, %arg1: i32) -> (i32, i32) {
    %c0_i32 = arith.constant 0 : i32
    %c0_i32_0 = arith.constant 0 : i32
    return %arg1, %c0_i32 : i32, i32
  }
  func.func @transform_4(%arg0: i32, %arg1: i32) -> (i32, i32) {
    %c0_i32 = arith.constant 0 : i32
    %c0_i32_0 = arith.constant 0 : i32
    return %c0_i32, %arg1 : i32, i32
  }
  func.func @transform_5(%arg0: i32, %arg1: i32) -> (i32, i32) {
    %c0_i32 = arith.constant 0 : i32
    return %arg0, %arg1 : i32, i32
  }
}

</mosaic_0001>

<llo_original>
// kernel: rnnlm_forward.3
$region0: #{rnnlm_forward.3}
  #allocation0 [shape = 'u32[]', space=smem, size = 0x4, offset = 0x4, fixed_abs, tag = 'smem constant byte address 0x4 - core index']
  #allocation1 [shape = 'u32[144,128]{1,0:T(1,128)}', space=vmem, size = 0x12000, scoped, tag = 'internal scratch']
  %s0 = inlined_call_operand.vmem [shape: f32[32,128], index: 0, kind: input, shape index: {}]
  %s1 = inlined_call_operand.vmem [shape: f32[1,128], index: 1, kind: input, shape index: {}]
  %s2 = inlined_call_operand.vmem [shape: f32[1,128], index: 2, kind: input, shape index: {}]
  %s3 = inlined_call_operand.vmem [shape: bf16[512,128], index: 3, kind: input, shape index: {}]
  %s4 = inlined_call_operand.vmem [shape: f32[1,512], index: 4, kind: input, shape index: {}]
  %s5 = inlined_call_operand.hbm [shape: f32[32,512], index: 5, kind: output, shape index: {}]
  %s6 = sld [smem:[#allocation0]]
  $region53: #{rnnlm_forward.3} parent=0
    _
  %s8 = ssub.s32 1, %s6
  %s9 = scalar_select 0, %s8, %s6
  $region1: #{rnnlm_forward.3} parent=0
    #allocation2 [shape = 'u8[65536]{0}', space=vmem, size = 0x10000, scoped, tag = 'output window, operand 0']
    #allocation3 [shape = 's32[2]{0}', space=sflag, size = 0x8, scoped, tag = 'scoped memory for rnnlm_forward.3']
    %10 = vsyncpa [#allocation3], 0
    %s11 = scalar_lea.sflag [#allocation3], 1
    %12 = vsyncpa %s11, 0
    loop: start=0, step=1, limit=4
    $region2: #{rnnlm_forward.3} parent=1 // loop_pre_header
      _
    $region3: #{rnnlm_forward.3} parent=1 // loop_header
      %s14 = sphi 0, %s18
      %p15 = scmp.ge.s32.totalorder %s14, 4
      %s21 = sphi 0, %s33
      %s22 = sphi 0, %s29
      %s23 = sphi 0, %s21
      %s24 = sphi 0, %s22
      %s25 = sphi 0, %s23
      %s26 = sphi 0, %s24
      %s36 = sphi 0, %s38
      %s39 = sphi 0, %s36
      %s40 = sphi 0, %s39
      %s56 = sphi 0, %s40
      %s60 = sphi 0, %s60
      %s62 = sphi 0, %s60
      %s63 = sphi 0, %s62
      %s77 = sphi 0, %s63
      %s81 = sphi 0, %s81
      %s83 = sphi 0, %s81
      %s84 = sphi 0, %s83
      %s98 = sphi 0, %s84
      %s104 = sphi 0, %s106
      %s107 = sphi 0, %s104
      %s108 = sphi 0, %s107
      %s124 = sphi 0, %s108
      %s130 = sphi 0, %s132
      %s133 = sphi 0, %s130
      %s134 = sphi 0, %s133
      %s150 = sphi 0, %s134
      %s158 = sphi 0, %s160
      %s161 = sphi 0, %s158
      %s162 = sphi 0, %s161
      %s178 = sphi 0, %s162
    $region4: #{rnnlm_forward.3} parent=1 // loop_header_branch
      %17 = sbr.rel (%p15) target = $region8
    $region5: #{rnnlm_forward.3} parent=1 // loop_body
      %s19 = ssub.s32 %s14, 1
      %s20 = ssub.s32 %s14, 2
      %s27 = sadd.s32 1, %s22
      %p28 = scmp.ge.s32.totalorder %s27, 2
      %s29 = scalar_select %p28, 0, %s27
      %s30 = sadd.s32 1, %s21
      %s31 = scalar_select %p28, %s30, %s21
      %p32 = scmp.ge.s32.totalorder %s31, 1
      %s33 = scalar_select %p32, 0, %s31
      %s34 = ssub.s32 %s21, %s33
      %p35 = scmp.eq.s32.totalorder %s34, 0
      %s37 = sadd.s32 %s36, 1
      %s38 = scalar_select %p35, %s36, %s37
      %p41 = pneg %p35
      %p42 = scmp.eq.s32.totalorder %s14, 1
      %p43 = por %p41, %p42
      %p44 = scmp.ne.s32.totalorder %s36, %s39
      %p45 = scmp.eq.s32.totalorder %s14, 0
      %p46 = por %p44, %p45
      %p47 = scmp.ne.s32.totalorder %s36, %s39
      %p48 = scmp.eq.s32.totalorder %s19, 1
      %p49 = por %p47, %p48
      %p50 = scmp.ne.s32.totalorder %s39, %s40
      %p51 = scmp.eq.s32.totalorder %s19, 0
      %p52 = por %p50, %p51
      %p53 = scmp.ne.s32.totalorder %s39, %s40
      %p54 = scmp.eq.s32.totalorder %s20, 1
      %p55 = por %p53, %p54
      %p57 = scmp.ne.s32.totalorder %s40, %s56
      %p58 = scmp.eq.s32.totalorder %s20, 0
      %p59 = por %p57, %p58
      %s61 = sadd.s32 %s60, 1
      %p64 = scmp.eq.s32.totalorder %s14, 1
      %p65 = scmp.ne.s32.totalorder %s60, %s62
      %p66 = scmp.eq.s32.totalorder %s14, 0
      %p67 = por %p65, %p66
      %p68 = scmp.ne.s32.totalorder %s60, %s62
      %p69 = scmp.eq.s32.totalorder %s19, 1
      %p70 = por %p68, %p69
      %p71 = scmp.ne.s32.totalorder %s62, %s63
      %p72 = scmp.eq.s32.totalorder %s19, 0
      %p73 = por %p71, %p72
      %p74 = scmp.ne.s32.totalorder %s62, %s63
      %p75 = scmp.eq.s32.totalorder %s20, 1
      %p76 = por %p74, %p75
      %p78 = scmp.ne.s32.totalorder %s63, %s77
      %p79 = scmp.eq.s32.totalorder %s20, 0
      %p80 = por %p78, %p79
      %s82 = sadd.s32 %s81, 1
      %p85 = scmp.eq.s32.totalorder %s14, 1
      %p86 = scmp.ne.s32.totalorder %s81, %s83
      %p87 = scmp.eq.s32.totalorder %s14, 0
      %p88 = por %p86, %p87
      %p89 = scmp.ne.s32.totalorder %s81, %s83
      %p90 = scmp.eq.s32.totalorder %s19, 1
      %p91 = por %p89, %p90
      %p92 = scmp.ne.s32.totalorder %s83, %s84
      %p93 = scmp.eq.s32.totalorder %s19, 0
      %p94 = por %p92, %p93
      %p95 = scmp.ne.s32.totalorder %s83, %s84
      %p96 = scmp.eq.s32.totalorder %s20, 1
      %p97 = por %p95, %p96
      %p99 = scmp.ne.s32.totalorder %s84, %s98
      %p100 = scmp.eq.s32.totalorder %s20, 0
      %p101 = por %p99, %p100
      %s102 = ssub.s32 %s22, %s29
      %p103 = scmp.eq.s32.totalorder %s102, 0
      %s105 = sadd.s32 %s104, 1
      %s106 = scalar_select %p103, %s104, %s105
      %p109 = pneg %p103
      %p110 = scmp.eq.s32.totalorder %s14, 1
      %p111 = por %p109, %p110
      %p112 = scmp.ne.s32.totalorder %s104, %s107
      %p113 = scmp.eq.s32.totalorder %s14, 0
      %p114 = por %p112, %p113
      %p115 = scmp.ne.s32.totalorder %s104, %s107
      %p116 = scmp.eq.s32.totalorder %s19, 1
      %p117 = por %p115, %p116
      %p118 = scmp.ne.s32.totalorder %s107, %s108
      %p119 = scmp.eq.s32.totalorder %s19, 0
      %p120 = por %p118, %p119
      %p121 = scmp.ne.s32.totalorder %s107, %s108
      %p122 = scmp.eq.s32.totalorder %s20, 1
      %p123 = por %p121, %p122
      %p125 = scmp.ne.s32.totalorder %s108, %s124
      %p126 = scmp.eq.s32.totalorder %s20, 0
      %p127 = por %p125, %p126
      %s128 = ssub.s32 %s22, %s29
      %p129 = scmp.eq.s32.totalorder %s128, 0
      %s131 = sadd.s32 %s130, 1
      %s132 = scalar_select %p129, %s130, %s131
      %p135 = pneg %p129
      %p136 = scmp.eq.s32.totalorder %s14, 1
      %p137 = por %p135, %p136
      %p138 = scmp.ne.s32.totalorder %s130, %s133
      %p139 = scmp.eq.s32.totalorder %s14, 0
      %p140 = por %p138, %p139
      %p141 = scmp.ne.s32.totalorder %s130, %s133
      %p142 = scmp.eq.s32.totalorder %s19, 1
      %p143 = por %p141, %p142
      %p144 = scmp.ne.s32.totalorder %s133, %s134
      %p145 = scmp.eq.s32.totalorder %s19, 0
      %p146 = por %p144, %p145
      %p147 = scmp.ne.s32.totalorder %s133, %s134
      %p148 = scmp.eq.s32.totalorder %s20, 1
      %p149 = por %p147, %p148
      %p151 = scmp.ne.s32.totalorder %s134, %s150
      %p152 = scmp.eq.s32.totalorder %s20, 0
      %p153 = por %p151, %p152
      %s154 = ssub.s32 %s21, %s33
      %s155 = ssub.s32 %s22, %s29
      %s156 = sor.u32 %s154, %s155
      %p157 = scmp.eq.s32.totalorder %s156, 0
      %s159 = sadd.s32 %s158, 1
      %s160 = scalar_select %p157, %s158, %s159
      %p163 = pneg %p157
      %p164 = scmp.eq.s32.totalorder %s14, 1
      %p165 = por %p163, %p164
      %p166 = scmp.ne.s32.totalorder %s158, %s161
      %p167 = scmp.eq.s32.totalorder %s14, 0
      %p168 = por %p166, %p167
      %p169 = scmp.ne.s32.totalorder %s158, %s161
      %p170 = scmp.eq.s32.totalorder %s19, 1
      %p171 = por %p169, %p170
      %p172 = scmp.ne.s32.totalorder %s161, %s162
      %p173 = scmp.eq.s32.totalorder %s19, 0
      %p174 = por %p172, %p173
      %p175 = scmp.ne.s32.totalorder %s161, %s162
      %p176 = scmp.eq.s32.totalorder %s20, 1
      %p177 = por %p175, %p176
      %p179 = scmp.ne.s32.totalorder %s162, %s178
      %p180 = scmp.eq.s32.totalorder %s20, 0
      %p181 = por %p179, %p180
      %p182 = scmp.le.s32.totalorder 1, %s14
      %p183 = scmp.lt.s32.totalorder %s14, 3
      %p184 = pnand %p182, %p183
      %p185 = pneg %p184
      // Predicated region
      $region9: #{rnnlm_forward.3} parent=5 // pred_check
        _
      $region10: #{rnnlm_forward.3} parent=5 // pred_check_branch
        %187 = sbr.rel (%p184) target = $region12
      $region11: #{rnnlm_forward.3} parent=5 // pred_region
        %s188 = ssub.s32 %s14, 1
        // Predicated region
        $region13: #{rnnlm_forward.3} parent=11 // pred_check
          %p189 = pneg %p52
        $region14: #{rnnlm_forward.3} parent=11 // pred_check_branch
          %191 = sbr.rel (%p189) target = $region16
        $region15: #{rnnlm_forward.3} parent=11 // pred_region
          %s192 = smul.u32 4, %s23
          %p193 = scmp.lt.s32.totalorder %s192, 3
          %s194 = scalar_select %p193, %s192, 3
          %s195 = smul.addr %s194, 8
          %s196 = scalar_lea.vmem %s0, %s195
          %s197 = smul.u32 4, %s23
        $region16: #{rnnlm_forward.3} parent=11 // pred_fallthru
          _
        // Predicated region
        $region17: #{rnnlm_forward.3} parent=11 // pred_check
          %p198 = pneg %p73
        $region18: #{rnnlm_forward.3} parent=11 // pred_check_branch
          %200 = sbr.rel (%p198) target = $region20
        $region19: #{rnnlm_forward.3} parent=11 // pred_region
          _
        $region20: #{rnnlm_forward.3} parent=11 // pred_fallthru
          _
        // Predicated region
        $region21: #{rnnlm_forward.3} parent=11 // pred_check
          %p201 = pneg %p94
        $region22: #{rnnlm_forward.3} parent=11 // pred_check_branch
          %203 = sbr.rel (%p201) target = $region24
        $region23: #{rnnlm_forward.3} parent=11 // pred_region
          _
        $region24: #{rnnlm_forward.3} parent=11 // pred_fallthru
          _
      $region12: #{rnnlm_forward.3} parent=5 // pred_fallthru
        _
      %p204 = scmp.lt.s32.totalorder %s14, 2
      // Predicated region
      $region25: #{rnnlm_forward.3} parent=5 // pred_check
        %p205 = pneg %p204
      $region26: #{rnnlm_forward.3} parent=5 // pred_check_branch
        %207 = sbr.rel (%p205) target = $region28
      $region27: #{rnnlm_forward.3} parent=5 // pred_region
        // Predicated region
        $region29: #{rnnlm_forward.3} parent=27 // pred_check
          %p208 = pneg %p114
        $region30: #{rnnlm_forward.3} parent=27 // pred_check_branch
          %210 = sbr.rel (%p208) target = $region32
        $region31: #{rnnlm_forward.3} parent=27 // pred_region
          %s211 = smul.u32 32, %s22
          %p212 = scmp.lt.s32.totalorder %s211, 63
          %s213 = scalar_select %p212, %s211, 63
          %s214 = smul.addr %s213, 4
          %s215 = scalar_lea.vmem %s3, %s214
          %s216 = smul.u32 32, %s22
        $region32: #{rnnlm_forward.3} parent=27 // pred_fallthru
          _
        // Predicated region
        $region33: #{rnnlm_forward.3} parent=27 // pred_check
          %p217 = pneg %p140
        $region34: #{rnnlm_forward.3} parent=27 // pred_check_branch
          %219 = sbr.rel (%p217) target = $region36
        $region35: #{rnnlm_forward.3} parent=27 // pred_region
          %s220 = smul.u32 2, %s22
          %p221 = scmp.lt.s32.totalorder %s220, 3
          %s222 = scalar_select %p221, %s220, 3
          %s223 = scalar_lea.vmem %s4, %s222
          %s224 = smul.u32 2, %s22
        $region36: #{rnnlm_forward.3} parent=27 // pred_fallthru
          _
      $region28: #{rnnlm_forward.3} parent=5 // pred_fallthru
        _
      %p225 = scmp.le.s32.totalorder 1, %s14
      %p226 = scmp.lt.s32.totalorder %s14, 3
      %p227 = pnand %p225, %p226
      %p228 = pneg %p227
      // Predicated region
      $region37: #{rnnlm_forward.3} parent=5 // pred_check
        _
      $region38: #{rnnlm_forward.3} parent=5 // pred_check_branch
        %230 = sbr.rel (%p227) target = $region40
      $region39: #{rnnlm_forward.3} parent=5 // pred_region
        %s231 = ssub.s32 %s14, 1
        %s232 = smul.u32 4, %s23
        %p233 = scmp.lt.s32.totalorder %s232, 3
        %s234 = scalar_select %p233, %s232, 3
        %s235 = smul.addr %s234, 8
        %s236 = scalar_lea.vmem %s0, %s235
        %p237 = pneg %p52
        %p238 = pneg %p49
        %p239 = pneg %p73
        %p240 = pneg %p70
        %p241 = pneg %p94
        %p242 = pneg %p91
        %s243 = smul.u32 32, %s24
        %p244 = scmp.lt.s32.totalorder %s243, 63
        %s245 = scalar_select %p244, %s243, 63
        %s246 = smul.addr %s245, 4
        %s247 = scalar_lea.vmem %s3, %s246
        %p248 = pneg %p120
        %p249 = pneg %p117
        %s250 = smul.u32 2, %s24
        %p251 = scmp.lt.s32.totalorder %s250, 3
        %s252 = scalar_select %p251, %s250, 3
        %s253 = scalar_lea.vmem %s4, %s252
        %p254 = pneg %p146
        %p255 = pneg %p143
        %p256 = pneg %p174
        %p257 = pneg %p171
        %s258 = sand.u32 %s161, 1
        %s259 = scalar_lea.sflag [#allocation3], %s258
        %s260 = sand.u32 %s161, 1
        %s261 = smul.addr %s260, 64
        %s262 = scalar_lea.vmem [#allocation2], %s261
        %s263 = smul.u32 4, %s23
        %p264 = scmp.lt.s32.totalorder %s263, 3
        %s265 = scalar_select %p264, %s263, 3
        %s266 = smul.addr %s265, 8
        %s267 = scalar_lea.vmem %s0, %s266
        %s268 = smul.u32 4, %s23
        %s269 = smul.u32 32, %s24
        %p270 = scmp.lt.s32.totalorder %s269, 63
        %s271 = scalar_select %p270, %s269, 63
        %s272 = smul.addr %s271, 4
        %s273 = scalar_lea.vmem %s3, %s272
        %s274 = smul.u32 32, %s24
        %s275 = smul.u32 2, %s24
        %p276 = scmp.lt.s32.totalorder %s275, 3
        %s277 = scalar_select %p276, %s275, 3
        %s278 = scalar_lea.vmem %s4, %s277
        %s279 = smul.u32 2, %s24
        %s280 = smul.u32 4, %s23
        %s281 = smul.u32 2, %s24
        %v283 = vld [vmem:[%s267] sm:$0xff]
        %v284 = vld [vmem:[%s267 + $0x8] sm:$0xff]
        %v285 = vld [vmem:[%s267 + $0x10] sm:$0xff]
        %v286 = vld [vmem:[%s267 + $0x18] sm:$0xff]
        %287 = vadd.xlane.f32.xlu0 %v283
        %v288 = vpop.xlane.xlu0 %287
        %289 = vadd.xlane.f32.xlu0 %v284
        %v290 = vpop.xlane.xlu0 %289
        %291 = vadd.xlane.f32.xlu0 %v285
        %v292 = vpop.xlane.xlu0 %291
        %293 = vadd.xlane.f32.xlu0 %v286
        %v294 = vpop.xlane.xlu0 %293
        %v295 = vrcp.pop 128.0
        %v296 = vmul.f32 %v288, %v295
        %v297 = vmul.f32 %v290, %v295
        %v298 = vmul.f32 %v292, %v295
        %v299 = vmul.f32 %v294, %v295
        %v300 = vsub.f32 %v283, %v296
        %v301 = vsub.f32 %v284, %v297
        %v302 = vsub.f32 %v285, %v298
        %v303 = vsub.f32 %v286, %v299
        %v304 = vmul.f32 %v300, %v300
        %v305 = vmul.f32 %v301, %v301
        %v306 = vmul.f32 %v302, %v302
        %v307 = vmul.f32 %v303, %v303
        %308 = vadd.xlane.f32.xlu0 %v304
        %v309 = vpop.xlane.xlu0 %308
        %310 = vadd.xlane.f32.xlu0 %v305
        %v311 = vpop.xlane.xlu0 %310
        %312 = vadd.xlane.f32.xlu0 %v306
        %v313 = vpop.xlane.xlu0 %312
        %314 = vadd.xlane.f32.xlu0 %v307
        %v315 = vpop.xlane.xlu0 %314
        %v316 = vmul.f32 %v309, %v295
        %v317 = vmul.f32 %v311, %v295
        %v318 = vmul.f32 %v313, %v295
        %v319 = vmul.f32 %v315, %v295
        %v320 = vadd.f32 %v316, 1e-05
        %v321 = vadd.f32 %v317, 1e-05
        %v322 = vadd.f32 %v318, 1e-05
        %v323 = vadd.f32 %v319, 1e-05
        %v324 = vrsqrt.pop %v320
        %v325 = vrsqrt.pop %v321
        %v326 = vrsqrt.pop %v322
        %v327 = vrsqrt.pop %v323
        %v328 = vmul.f32 %v300, %v324
        %v329 = vmul.f32 %v301, %v325
        %v330 = vmul.f32 %v302, %v326
        %v331 = vmul.f32 %v303, %v327
        %v332 = vld [vmem:[%s1] sm:$0x1]
        %v334 = vlaneseq
        %v335 = vshrl.u32 %v334, 7
        %v336 = vsub.s32 0, %v335
        %v337 = vrot.slane %v332, %v336
        %v339 = vmul.f32 %v328, %v337
        %v340 = vmul.f32 %v329, %v337
        %v341 = vmul.f32 %v330, %v337
        %v342 = vmul.f32 %v331, %v337
        %v343 = vld [vmem:[%s2] sm:$0x1]
        %v345 = vlaneseq
        %v346 = vshrl.u32 %v345, 7
        %v347 = vsub.s32 0, %v346
        %v348 = vrot.slane %v343, %v347
        %v350 = vadd.f32 %v339, %v348
        %v351 = vadd.f32 %v340, %v348
        %v352 = vadd.f32 %v341, %v348
        %v353 = vadd.f32 %v342, %v348
        %v354 = vpack.c.bf16 %v351, %v350
        %v355 = vpack.c.bf16 %v353, %v352
        %v356 = vld [vmem:[%s273] sm:$0xf]
        %v357 = vld [vmem:[%s273 + $0x4] sm:$0xf]
        %v358 = vld [vmem:[%s273 + $0x8] sm:$0xf]
        %v359 = vld [vmem:[%s273 + $0xc] sm:$0xf]
        %v360 = vld [vmem:[%s273 + $0x10] sm:$0xf]
        %v361 = vld [vmem:[%s273 + $0x14] sm:$0xf]
        %v362 = vld [vmem:[%s273 + $0x18] sm:$0xf]
        %v363 = vld [vmem:[%s273 + $0x1c] sm:$0xf]
        %v364 = vld [vmem:[%s273 + $0x20] sm:$0xf]
        %v365 = vld [vmem:[%s273 + $0x24] sm:$0xf]
        %v366 = vld [vmem:[%s273 + $0x28] sm:$0xf]
        %v367 = vld [vmem:[%s273 + $0x2c] sm:$0xf]
        %v368 = vld [vmem:[%s273 + $0x30] sm:$0xf]
        %v369 = vld [vmem:[%s273 + $0x34] sm:$0xf]
        %v370 = vld [vmem:[%s273 + $0x38] sm:$0xf]
        %v371 = vld [vmem:[%s273 + $0x3c] sm:$0xf]
        %v372 = vld [vmem:[%s273 + $0x40] sm:$0xf]
        %v373 = vld [vmem:[%s273 + $0x44] sm:$0xf]
        %v374 = vld [vmem:[%s273 + $0x48] sm:$0xf]
        %v375 = vld [vmem:[%s273 + $0x4c] sm:$0xf]
        %v376 = vld [vmem:[%s273 + $0x50] sm:$0xf]
        %v377 = vld [vmem:[%s273 + $0x54] sm:$0xf]
        %v378 = vld [vmem:[%s273 + $0x58] sm:$0xf]
        %v379 = vld [vmem:[%s273 + $0x5c] sm:$0xf]
        %v380 = vld [vmem:[%s273 + $0x60] sm:$0xf]
        %v381 = vld [vmem:[%s273 + $0x64] sm:$0xf]
        %v382 = vld [vmem:[%s273 + $0x68] sm:$0xf]
        %v383 = vld [vmem:[%s273 + $0x6c] sm:$0xf]
        %v384 = vld [vmem:[%s273 + $0x70] sm:$0xf]
        %v385 = vld [vmem:[%s273 + $0x74] sm:$0xf]
        %v386 = vld [vmem:[%s273 + $0x78] sm:$0xf]
        %v387 = vld [vmem:[%s273 + $0x7c] sm:$0xf]
        %v388 = vld [vmem:[%s278] sm:$0x3]
        %v390 = vlaneseq
        %v391 = vshrl.u32 %v390, 7
        %v392 = vsub.s32 0, %v391
        %v393 = vrot.slane %v388, %v392
        %v394 = vlaneseq
        %v395 = vshrl.u32 %v394, 7
        %v396 = vsub.s32 1, %v395
        %v397 = vrot.slane %v388, %v396
        %v432 = vunpack.c.l.b16 %v356
        %v433 = vunpack.c.l.b16 %v357
        %v434 = vunpack.c.l.b16 %v358
        %v435 = vunpack.c.l.b16 %v359
        %v436 = vunpack.c.l.b16 %v360
        %v437 = vunpack.c.l.b16 %v361
        %v438 = vunpack.c.l.b16 %v362
        %v439 = vunpack.c.l.b16 %v363
        %v440 = vunpack.c.l.b16 %v364
        %v441 = vunpack.c.l.b16 %v365
        %v442 = vunpack.c.l.b16 %v366
        %v443 = vunpack.c.l.b16 %v367
        %v444 = vunpack.c.l.b16 %v368
        %v445 = vunpack.c.l.b16 %v369
        %v446 = vunpack.c.l.b16 %v370
        %v447 = vunpack.c.l.b16 %v371
        %v448 = vunpack.c.l.b16 %v372
        %v449 = vunpack.c.l.b16 %v373
        %v450 = vunpack.c.l.b16 %v374
        %v451 = vunpack.c.l.b16 %v375
        %v452 = vunpack.c.l.b16 %v376
        %v453 = vunpack.c.l.b16 %v377
        %v454 = vunpack.c.l.b16 %v378
        %v455 = vunpack.c.l.b16 %v379
        %v456 = vunpack.c.l.b16 %v380
        %v457 = vunpack.c.l.b16 %v381
        %v458 = vunpack.c.l.b16 %v382
        %v459 = vunpack.c.l.b16 %v383
        %v460 = vunpack.c.l.b16 %v384
        %v461 = vunpack.c.l.b16 %v385
        %v462 = vunpack.c.l.b16 %v386
        %v463 = vunpack.c.l.b16 %v387
        %v464 = vpack.c.b16 %v433, %v432
        %v465 = vpack.c.b16 %v435, %v434
        %v466 = vpack.c.b16 %v437, %v436
        %v467 = vpack.c.b16 %v439, %v438
        %v468 = vpack.c.b16 %v441, %v440
        %v469 = vpack.c.b16 %v443, %v442
        %v470 = vpack.c.b16 %v445, %v444
        %v471 = vpack.c.b16 %v447, %v446
        %v472 = vpack.c.b16 %v449, %v448
        %v473 = vpack.c.b16 %v451, %v450
        %v474 = vpack.c.b16 %v453, %v452
        %v475 = vpack.c.b16 %v455, %v454
        %v476 = vpack.c.b16 %v457, %v456
        %v477 = vpack.c.b16 %v459, %v458
        %v478 = vpack.c.b16 %v461, %v460
        %v479 = vpack.c.b16 %v463, %v462
        %496 = vmatprep.subr.bf16.mxu0 0
        %497 = vmatpush1.bf16.xpose.msra.mxu0 %v471
        %498 = vmatprep.subr.bf16.mxu0 0
        %499 = vmatpush1.bf16.xpose.msra.mxu0 %v470
        %500 = vmatprep.subr.bf16.mxu0 0
        %501 = vmatpush1.bf16.xpose.msra.mxu0 %v469
        %502 = vmatprep.subr.bf16.mxu0 0
        %503 = vmatpush1.bf16.xpose.msra.mxu0 %v468
        %504 = vmatprep.subr.bf16.mxu0 0
        %505 = vmatpush1.bf16.xpose.msra.mxu0 %v467
        %506 = vmatprep.subr.bf16.mxu0 0
        %507 = vmatpush1.bf16.xpose.msra.mxu0 %v466
        %508 = vmatprep.subr.bf16.mxu0 0
        %509 = vmatpush1.bf16.xpose.msra.mxu0 %v465
        %510 = vmatprep.subr.bf16.mxu0 0
        %511 = vmatpush1.bf16.xpose.msra.mxu0 %v464
        %512 = vmatprep.subr.bf16.mxu0 0
        %513 = vmatpush2.bf16.xpose.msra.mxu0 %v479
        %514 = vmatprep.subr.bf16.mxu0 0
        %515 = vmatpush2.bf16.xpose.msra.mxu0 %v478
        %516 = vmatprep.subr.bf16.mxu0 0
        %517 = vmatpush2.bf16.xpose.msra.mxu0 %v477
        %518 = vmatprep.subr.bf16.mxu0 0
        %519 = vmatpush2.bf16.xpose.msra.mxu0 %v476
        %520 = vmatprep.subr.bf16.mxu0 0
        %521 = vmatpush2.bf16.xpose.msra.mxu0 %v475
        %522 = vmatprep.subr.bf16.mxu0 0
        %523 = vmatpush2.bf16.xpose.msra.mxu0 %v474
        %524 = vmatprep.subr.bf16.mxu0 0
        %525 = vmatpush2.bf16.xpose.msra.mxu0 %v473
        %526 = vmatprep.subr.bf16.mxu0 0
        %527 = vmatpush2.bf16.xpose.msra.mxu0 %v472
        %528 = vmatprep.mubr.bf16.mxu0 0
        %529 = vmatmul.mubr.bf16.gmra.mxu0 %v354
        %v530 = vpop.f32.mrf.mxu0
        %v531 = vadd.f32 %v393, %v530
        %v532 = vpop.f32.mrf.mxu0
        %v533 = vadd.f32 %v397, %v532
        %v534 = vpop.f32.mrf.mxu0
        %v535 = vadd.f32 %v393, %v534
        %v536 = vpop.f32.mrf.mxu0
        %v537 = vadd.f32 %v397, %v536
        %538 = vmatprep.mubr.bf16.mxu0 0
        %539 = vmatmul.mubr.bf16.gmra.mxu0 %v355
        %v540 = vpop.f32.mrf.mxu0
        %v541 = vadd.f32 %v393, %v540
        %v542 = vpop.f32.mrf.mxu0
        %v543 = vadd.f32 %v397, %v542
        %v544 = vpop.f32.mrf.mxu0
        %v545 = vadd.f32 %v393, %v544
        %v546 = vpop.f32.mrf.mxu0
        %v547 = vadd.f32 %v397, %v546
        %548 = vdwg.mxu0
        %549 = vst [vmem:[%s262] sm:$0xff] %v531
        %550 = vst [vmem:[%s262 + $0x8] sm:$0xff] %v533
        %551 = vst [vmem:[%s262 + $0x10] sm:$0xff] %v535
        %552 = vst [vmem:[%s262 + $0x18] sm:$0xff] %v537
        %553 = vst [vmem:[%s262 + $0x20] sm:$0xff] %v541
        %554 = vst [vmem:[%s262 + $0x28] sm:$0xff] %v543
        %555 = vst [vmem:[%s262 + $0x30] sm:$0xff] %v545
        %556 = vst [vmem:[%s262 + $0x38] sm:$0xff] %v547
        %s557 = sand.u32 %s161, 1
        %s558 = scalar_lea.sflag [#allocation3], %s557
        %s559 = sand.u32 %s161, 1
        %s560 = smul.addr %s559, 64
        %s561 = scalar_lea.vmem [#allocation2], %s560
        // Predicated region
        $region41: #{rnnlm_forward.3} parent=39 // pred_check
          %p562 = pneg %p171
        $region42: #{rnnlm_forward.3} parent=39 // pred_check_branch
          %564 = sbr.rel (%p562) target = $region44
        $region43: #{rnnlm_forward.3} parent=39 // pred_region
          %s565 = smul.u32 4, %s23
          %s566 = smul.u32 2, %s24
          %s568 = ssub.s32 1024, 1024
          %569 = vsyncadd %s558, %s568
          %s570 = smul.addr %s565, 4
          %s571 = sadd.s32 %s566, %s570
          %s572 = smul.addr %s571, 128
          %s573 = scalar_lea.hbm %s5, %s572
          %s574 = sshll.u32 %s561, 4
          %s575 = int_to_ptr.vmem [resolvable:$true] %s574
          %580 = dma.vmem_to_hbm [thread:$0]  %s575, 1024, %s573, %s558, 256, 512, 16
        $region44: #{rnnlm_forward.3} parent=39 // pred_fallthru
          _
      $region40: #{rnnlm_forward.3} parent=5 // pred_fallthru
        _
      %p581 = scmp.le.s32.totalorder 2, %s14
      // Predicated region
      $region45: #{rnnlm_forward.3} parent=5 // pred_check
        %p582 = pneg %p581
      $region46: #{rnnlm_forward.3} parent=5 // pred_check_branch
        %584 = sbr.rel (%p582) target = $region48
      $region47: #{rnnlm_forward.3} parent=5 // pred_region
        %s585 = ssub.s32 %s14, 2
        // Predicated region
        $region49: #{rnnlm_forward.3} parent=47 // pred_check
          %p586 = pneg %p177
        $region50: #{rnnlm_forward.3} parent=47 // pred_check_branch
          %588 = sbr.rel (%p586) target = $region52
        $region51: #{rnnlm_forward.3} parent=47 // pred_region
          %s589 = sand.u32 %s162, 1
          %s590 = scalar_lea.sflag [#allocation3], %s589
          %s591 = sand.u32 %s162, 1
          %s592 = smul.addr %s591, 64
          %s593 = scalar_lea.vmem [#allocation2], %s592
          %594 = dma.done %s590, 1024
        $region52: #{rnnlm_forward.3} parent=47 // pred_fallthru
          _
      $region48: #{rnnlm_forward.3} parent=5 // pred_fallthru
        _
    $region6: #{rnnlm_forward.3} parent=1 // loop_footer
      %s18 = sadd.s32 1, %s14
    $region7: #{rnnlm_forward.3} parent=1 // loop_footer_branch
      %13 = sbr.rel target = $region3
    $region8: #{rnnlm_forward.3} parent=1 // loop_exit
      _
    %595 = vsyncpa [#allocation3], 1
    %s596 = scalar_lea.sflag [#allocation3], 1
    %597 = vsyncpa %s596, 1

// kernel: rnnlm_forward.2
$region0: #{rnnlm_forward.2}
  #allocation0 [shape = 'u32[]', space=smem, size = 0x4, offset = 0x4, fixed_abs, tag = 'smem constant byte address 0x4 - core index']
  #allocation1 [shape = 'u32[144,128]{1,0:T(1,128)}', space=vmem, size = 0x12000, scoped, tag = 'internal scratch']
  #allocation2 [shape = 'f32[2,8,128]{2,1,0:T(8,128)}', space=vmem, size = 0x2000, scoped, tag = 'scratch operand']
  %s0 = inlined_call_operand.vmem [shape: f32[16,8,128], index: 0, kind: input, shape index: {}]
  %s1 = inlined_call_operand.vmem [shape: bf16[2,128,128], index: 1, kind: input, shape index: {}]
  %s2 = inlined_call_operand.vmem [shape: bf16[2,128,128], index: 2, kind: input, shape index: {}]
  %s3 = inlined_call_operand.vmem [shape: f32[2,1,128], index: 3, kind: input, shape index: {}]
  %s4 = inlined_call_operand.vmem [shape: f32[1,1,128], index: 4, kind: input, shape index: {}]
  %s5 = inlined_call_operand.vmem [shape: f32[1,1,128], index: 5, kind: input, shape index: {}]
  %s6 = inlined_call_operand.vmem [shape: f32[16,8,128], index: 6, kind: output, shape index: {}]
  %s7 = sld [smem:[#allocation0]]
  $region61: #{rnnlm_forward.2} parent=0
    _
  %s9 = ssub.s32 1, %s7
  %s10 = scalar_select 0, %s9, %s7
  loop: start=0, step=1, limit=4
  $region2: #{rnnlm_forward.2} parent=0 // loop_pre_header
    _
  $region3: #{rnnlm_forward.2} parent=0 // loop_header
    %s12 = sphi 0, %s16
    %p13 = scmp.ge.s32.totalorder %s12, 4
    %s22 = sphi 0, %s24
    %s25 = sphi 0, %s22
    %s26 = sphi 0, %s25
    %s42 = sphi 0, %s26
    %s46 = sphi 0, %s46
    %s48 = sphi 0, %s46
    %s49 = sphi 0, %s48
    %s63 = sphi 0, %s49
    %s67 = sphi 0, %s67
    %s69 = sphi 0, %s67
    %s70 = sphi 0, %s69
    %s84 = sphi 0, %s70
    %s88 = sphi 0, %s88
    %s90 = sphi 0, %s88
    %s91 = sphi 0, %s90
    %s105 = sphi 0, %s91
    %s109 = sphi 0, %s109
    %s111 = sphi 0, %s109
    %s112 = sphi 0, %s111
    %s126 = sphi 0, %s112
    %s130 = sphi 0, %s130
    %s132 = sphi 0, %s130
    %s133 = sphi 0, %s132
    %s147 = sphi 0, %s133
    %s153 = sphi 0, %s155
    %s156 = sphi 0, %s153
    %s157 = sphi 0, %s156
    %s173 = sphi 0, %s157
  $region4: #{rnnlm_forward.2} parent=0 // loop_header_branch
    %15 = sbr.rel (%p13) target = $region8
  $region5: #{rnnlm_forward.2} parent=0 // loop_body
    %s17 = ssub.s32 %s12, 1
    %s18 = ssub.s32 %s12, 2
    %s19 = sadd.s32 %s12, 1
    %s20 = ssub.s32 %s12, %s19
    %p21 = scmp.eq.s32.totalorder %s20, 0
    %s23 = sadd.s32 %s22, 1
    %s24 = scalar_select %p21, %s22, %s23
    %p27 = pneg %p21
    %p28 = scmp.eq.s32.totalorder %s12, 1
    %p29 = por %p27, %p28
    %p30 = scmp.ne.s32.totalorder %s22, %s25
    %p31 = scmp.eq.s32.totalorder %s12, 0
    %p32 = por %p30, %p31
    %p33 = scmp.ne.s32.totalorder %s22, %s25
    %p34 = scmp.eq.s32.totalorder %s17, 1
    %p35 = por %p33, %p34
    %p36 = scmp.ne.s32.totalorder %s25, %s26
    %p37 = scmp.eq.s32.totalorder %s17, 0
    %p38 = por %p36, %p37
    %p39 = scmp.ne.s32.totalorder %s25, %s26
    %p40 = scmp.eq.s32.totalorder %s18, 1
    %p41 = por %p39, %p40
    %p43 = scmp.ne.s32.totalorder %s26, %s42
    %p44 = scmp.eq.s32.totalorder %s18, 0
    %p45 = por %p43, %p44
    %s47 = sadd.s32 %s46, 1
    %p50 = scmp.eq.s32.totalorder %s12, 1
    %p51 = scmp.ne.s32.totalorder %s46, %s48
    %p52 = scmp.eq.s32.totalorder %s12, 0
    %p53 = por %p51, %p52
    %p54 = scmp.ne.s32.totalorder %s46, %s48
    %p55 = scmp.eq.s32.totalorder %s17, 1
    %p56 = por %p54, %p55
    %p57 = scmp.ne.s32.totalorder %s48, %s49
    %p58 = scmp.eq.s32.totalorder %s17, 0
    %p59 = por %p57, %p58
    %p60 = scmp.ne.s32.totalorder %s48, %s49
    %p61 = scmp.eq.s32.totalorder %s18, 1
    %p62 = por %p60, %p61
    %p64 = scmp.ne.s32.totalorder %s49, %s63
    %p65 = scmp.eq.s32.totalorder %s18, 0
    %p66 = por %p64, %p65
    %s68 = sadd.s32 %s67, 1
    %p71 = scmp.eq.s32.totalorder %s12, 1
    %p72 = scmp.ne.s32.totalorder %s67, %s69
    %p73 = scmp.eq.s32.totalorder %s12, 0
    %p74 = por %p72, %p73
    %p75 = scmp.ne.s32.totalorder %s67, %s69
    %p76 = scmp.eq.s32.totalorder %s17, 1
    %p77 = por %p75, %p76
    %p78 = scmp.ne.s32.totalorder %s69, %s70
    %p79 = scmp.eq.s32.totalorder %s17, 0
    %p80 = por %p78, %p79
    %p81 = scmp.ne.s32.totalorder %s69, %s70
    %p82 = scmp.eq.s32.totalorder %s18, 1
    %p83 = por %p81, %p82
    %p85 = scmp.ne.s32.totalorder %s70, %s84
    %p86 = scmp.eq.s32.totalorder %s18, 0
    %p87 = por %p85, %p86
    %s89 = sadd.s32 %s88, 1
    %p92 = scmp.eq.s32.totalorder %s12, 1
    %p93 = scmp.ne.s32.totalorder %s88, %s90
    %p94 = scmp.eq.s32.totalorder %s12, 0
    %p95 = por %p93, %p94
    %p96 = scmp.ne.s32.totalorder %s88, %s90
    %p97 = scmp.eq.s32.totalorder %s17, 1
    %p98 = por %p96, %p97
    %p99 = scmp.ne.s32.totalorder %s90, %s91
    %p100 = scmp.eq.s32.totalorder %s17, 0
    %p101 = por %p99, %p100
    %p102 = scmp.ne.s32.totalorder %s90, %s91
    %p103 = scmp.eq.s32.totalorder %s18, 1
    %p104 = por %p102, %p103
    %p106 = scmp.ne.s32.totalorder %s91, %s105
    %p107 = scmp.eq.s32.totalorder %s18, 0
    %p108 = por %p106, %p107
    %s110 = sadd.s32 %s109, 1
    %p113 = scmp.eq.s32.totalorder %s12, 1
    %p114 = scmp.ne.s32.totalorder %s109, %s111
    %p115 = scmp.eq.s32.totalorder %s12, 0
    %p116 = por %p114, %p115
    %p117 = scmp.ne.s32.totalorder %s109, %s111
    %p118 = scmp.eq.s32.totalorder %s17, 1
    %p119 = por %p117, %p118
    %p120 = scmp.ne.s32.totalorder %s111, %s112
    %p121 = scmp.eq.s32.totalorder %s17, 0
    %p122 = por %p120, %p121
    %p123 = scmp.ne.s32.totalorder %s111, %s112
    %p124 = scmp.eq.s32.totalorder %s18, 1
    %p125 = por %p123, %p124
    %p127 = scmp.ne.s32.totalorder %s112, %s126
    %p128 = scmp.eq.s32.totalorder %s18, 0
    %p129 = por %p127, %p128
    %s131 = sadd.s32 %s130, 1
    %p134 = scmp.eq.s32.totalorder %s12, 1
    %p135 = scmp.ne.s32.totalorder %s130, %s132
    %p136 = scmp.eq.s32.totalorder %s12, 0
    %p137 = por %p135, %p136
    %p138 = scmp.ne.s32.totalorder %s130, %s132
    %p139 = scmp.eq.s32.totalorder %s17, 1
    %p140 = por %p138, %p139
    %p141 = scmp.ne.s32.totalorder %s132, %s133
    %p142 = scmp.eq.s32.totalorder %s17, 0
    %p143 = por %p141, %p142
    %p144 = scmp.ne.s32.totalorder %s132, %s133
    %p145 = scmp.eq.s32.totalorder %s18, 1
    %p146 = por %p144, %p145
    %p148 = scmp.ne.s32.totalorder %s133, %s147
    %p149 = scmp.eq.s32.totalorder %s18, 0
    %p150 = por %p148, %p149
    %s151 = ssub.s32 %s12, %s19
    %p152 = scmp.eq.s32.totalorder %s151, 0
    %s154 = sadd.s32 %s153, 1
    %s155 = scalar_select %p152, %s153, %s154
    %p158 = pneg %p152
    %p159 = scmp.eq.s32.totalorder %s12, 1
    %p160 = por %p158, %p159
    %p161 = scmp.ne.s32.totalorder %s153, %s156
    %p162 = scmp.eq.s32.totalorder %s12, 0
    %p163 = por %p161, %p162
    %p164 = scmp.ne.s32.totalorder %s153, %s156
    %p165 = scmp.eq.s32.totalorder %s17, 1
    %p166 = por %p164, %p165
    %p167 = scmp.ne.s32.totalorder %s156, %s157
    %p168 = scmp.eq.s32.totalorder %s17, 0
    %p169 = por %p167, %p168
    %p170 = scmp.ne.s32.totalorder %s156, %s157
    %p171 = scmp.eq.s32.totalorder %s18, 1
    %p172 = por %p170, %p171
    %p174 = scmp.ne.s32.totalorder %s157, %s173
    %p175 = scmp.eq.s32.totalorder %s18, 0
    %p176 = por %p174, %p175
    %p177 = scmp.le.s32.totalorder 1, %s12
    %p178 = scmp.lt.s32.totalorder %s12, 3
    %p179 = pnand %p177, %p178
    %p180 = pneg %p179
    // Predicated region
    $region9: #{rnnlm_forward.2} parent=5 // pred_check
      _
    $region10: #{rnnlm_forward.2} parent=5 // pred_check_branch
      %182 = sbr.rel (%p179) target = $region12
    $region11: #{rnnlm_forward.2} parent=5 // pred_region
      %s183 = ssub.s32 %s12, 1
      // Predicated region
      $region13: #{rnnlm_forward.2} parent=11 // pred_check
        %p184 = pneg %p59
      $region14: #{rnnlm_forward.2} parent=11 // pred_check_branch
        %186 = sbr.rel (%p184) target = $region16
      $region15: #{rnnlm_forward.2} parent=11 // pred_region
        _
      $region16: #{rnnlm_forward.2} parent=11 // pred_fallthru
        _
      // Predicated region
      $region17: #{rnnlm_forward.2} parent=11 // pred_check
        %p187 = pneg %p80
      $region18: #{rnnlm_forward.2} parent=11 // pred_check_branch
        %189 = sbr.rel (%p187) target = $region20
      $region19: #{rnnlm_forward.2} parent=11 // pred_region
        _
      $region20: #{rnnlm_forward.2} parent=11 // pred_fallthru
        _
      // Predicated region
      $region21: #{rnnlm_forward.2} parent=11 // pred_check
        %p190 = pneg %p101
      $region22: #{rnnlm_forward.2} parent=11 // pred_check_branch
        %192 = sbr.rel (%p190) target = $region24
      $region23: #{rnnlm_forward.2} parent=11 // pred_region
        _
      $region24: #{rnnlm_forward.2} parent=11 // pred_fallthru
        _
      // Predicated region
      $region25: #{rnnlm_forward.2} parent=11 // pred_check
        %p193 = pneg %p122
      $region26: #{rnnlm_forward.2} parent=11 // pred_check_branch
        %195 = sbr.rel (%p193) target = $region28
      $region27: #{rnnlm_forward.2} parent=11 // pred_region
        _
      $region28: #{rnnlm_forward.2} parent=11 // pred_fallthru
        _
      // Predicated region
      $region29: #{rnnlm_forward.2} parent=11 // pred_check
        %p196 = pneg %p143
      $region30: #{rnnlm_forward.2} parent=11 // pred_check_branch
        %198 = sbr.rel (%p196) target = $region32
      $region31: #{rnnlm_forward.2} parent=11 // pred_region
        _
      $region32: #{rnnlm_forward.2} parent=11 // pred_fallthru
        _
    $region12: #{rnnlm_forward.2} parent=5 // pred_fallthru
      _
    %p199 = scmp.lt.s32.totalorder %s12, 2
    // Predicated region
    $region33: #{rnnlm_forward.2} parent=5 // pred_check
      %p200 = pneg %p199
    $region34: #{rnnlm_forward.2} parent=5 // pred_check_branch
      %202 = sbr.rel (%p200) target = $region36
    $region35: #{rnnlm_forward.2} parent=5 // pred_region
      // Predicated region
      $region37: #{rnnlm_forward.2} parent=35 // pred_check
        %p203 = pneg %p32
      $region38: #{rnnlm_forward.2} parent=35 // pred_check_branch
        %205 = sbr.rel (%p203) target = $region40
      $region39: #{rnnlm_forward.2} parent=35 // pred_region
        %s206 = smul.u32 8, %s12
        %p207 = scmp.lt.s32.totalorder %s206, 15
        %s208 = scalar_select %p207, %s206, 15
        %s209 = smul.addr %s208, 8
        %s210 = scalar_lea.vmem %s0, %s209
        %s211 = smul.u32 8, %s12
      $region40: #{rnnlm_forward.2} parent=35 // pred_fallthru
        _
    $region36: #{rnnlm_forward.2} parent=5 // pred_fallthru
      _
    %p212 = scmp.le.s32.totalorder 1, %s12
    %p213 = scmp.lt.s32.totalorder %s12, 3
    %p214 = pnand %p212, %p213
    %p215 = pneg %p214
    // Predicated region
    $region41: #{rnnlm_forward.2} parent=5 // pred_check
      _
    $region42: #{rnnlm_forward.2} parent=5 // pred_check_branch
      %217 = sbr.rel (%p214) target = $region44
    $region43: #{rnnlm_forward.2} parent=5 // pred_region
      %s218 = ssub.s32 %s12, 1
      %s219 = smul.u32 8, %s17
      %p220 = scmp.lt.s32.totalorder %s219, 15
      %s221 = scalar_select %p220, %s219, 15
      %s222 = smul.addr %s221, 8
      %s223 = scalar_lea.vmem %s0, %s222
      %p224 = pneg %p38
      %p225 = pneg %p35
      %p226 = pneg %p59
      %p227 = pneg %p56
      %p228 = pneg %p80
      %p229 = pneg %p77
      %p230 = pneg %p101
      %p231 = pneg %p98
      %p232 = pneg %p122
      %p233 = pneg %p119
      %p234 = pneg %p143
      %p235 = pneg %p140
      %p236 = pneg %p169
      %p237 = pneg %p166
      %s238 = smul.u32 8, %s17
      %p239 = scmp.lt.s32.totalorder %s238, 15
      %s240 = scalar_select %p239, %s238, 15
      %s241 = smul.addr %s240, 8
      %s242 = scalar_lea.vmem %s6, %s241
      %s243 = smul.u32 8, %s17
      %p244 = scmp.lt.s32.totalorder %s243, 15
      %s245 = scalar_select %p244, %s243, 15
      %s246 = smul.addr %s245, 8
      %s247 = scalar_lea.vmem %s0, %s246
      %s248 = smul.u32 8, %s17
      %s249 = smul.u32 8, %s17
      %p250 = scmp.lt.s32.totalorder %s249, 15
      %s251 = scalar_select %p250, %s249, 15
      %s252 = smul.addr %s251, 8
      %s253 = scalar_lea.vmem %s6, %s252
      %s254 = smul.u32 8, %s17
      %p256 = scmp.eq.s32.totalorder %s17, 0
      // Predicated region
      $region45: #{rnnlm_forward.2} parent=43 // pred_check
        %p257 = pneg %p256
      $region46: #{rnnlm_forward.2} parent=43 // pred_check_branch
        %259 = sbr.rel (%p257) target = $region48
      $region47: #{rnnlm_forward.2} parent=43 // pred_region
        %260 = vst [vmem:[#allocation2] sm:$0xff] 0.0
        %261 = vst [vmem:[#allocation2 + $0x8] sm:$0xff] 0.0
      $region48: #{rnnlm_forward.2} parent=43 // pred_fallthru
        _
      %v262 = vld [vmem:[%s247] sm:$0xff]
      %v263 = vld [vmem:[%s247 + $0x8] sm:$0xff]
      %v264 = vld [vmem:[%s247 + $0x10] sm:$0xff]
      %v265 = vld [vmem:[%s247 + $0x18] sm:$0xff]
      %v266 = vld [vmem:[%s247 + $0x20] sm:$0xff]
      %v267 = vld [vmem:[%s247 + $0x28] sm:$0xff]
      %v268 = vld [vmem:[%s247 + $0x30] sm:$0xff]
      %v269 = vld [vmem:[%s247 + $0x38] sm:$0xff]
      %270 = vadd.xlane.f32.xlu0 %v262
      %v271 = vpop.xlane.xlu0 %270
      %272 = vadd.xlane.f32.xlu0 %v263
      %v273 = vpop.xlane.xlu0 %272
      %274 = vadd.xlane.f32.xlu0 %v264
      %v275 = vpop.xlane.xlu0 %274
      %276 = vadd.xlane.f32.xlu0 %v265
      %v277 = vpop.xlane.xlu0 %276
      %278 = vadd.xlane.f32.xlu0 %v266
      %v279 = vpop.xlane.xlu0 %278
      %280 = vadd.xlane.f32.xlu0 %v267
      %v281 = vpop.xlane.xlu0 %280
      %282 = vadd.xlane.f32.xlu0 %v268
      %v283 = vpop.xlane.xlu0 %282
      %284 = vadd.xlane.f32.xlu0 %v269
      %v285 = vpop.xlane.xlu0 %284
      %v286 = vrcp.pop 128.0
      %v287 = vmul.f32 %v271, %v286
      %v288 = vmul.f32 %v273, %v286
      %v289 = vmul.f32 %v275, %v286
      %v290 = vmul.f32 %v277, %v286
      %v291 = vmul.f32 %v279, %v286
      %v292 = vmul.f32 %v281, %v286
      %v293 = vmul.f32 %v283, %v286
      %v294 = vmul.f32 %v285, %v286
      %v295 = vsub.f32 %v262, %v287
      %v296 = vsub.f32 %v263, %v288
      %v297 = vsub.f32 %v264, %v289
      %v298 = vsub.f32 %v265, %v290
      %v299 = vsub.f32 %v266, %v291
      %v300 = vsub.f32 %v267, %v292
      %v301 = vsub.f32 %v268, %v293
      %v302 = vsub.f32 %v269, %v294
      %v303 = vmul.f32 %v295, %v295
      %v304 = vmul.f32 %v296, %v296
      %v305 = vmul.f32 %v297, %v297
      %v306 = vmul.f32 %v298, %v298
      %v307 = vmul.f32 %v299, %v299
      %v308 = vmul.f32 %v300, %v300
      %v309 = vmul.f32 %v301, %v301
      %v310 = vmul.f32 %v302, %v302
      %311 = vadd.xlane.f32.xlu0 %v303
      %v312 = vpop.xlane.xlu0 %311
      %313 = vadd.xlane.f32.xlu0 %v304
      %v314 = vpop.xlane.xlu0 %313
      %315 = vadd.xlane.f32.xlu0 %v305
      %v316 = vpop.xlane.xlu0 %315
      %317 = vadd.xlane.f32.xlu0 %v306
      %v318 = vpop.xlane.xlu0 %317
      %319 = vadd.xlane.f32.xlu0 %v307
      %v320 = vpop.xlane.xlu0 %319
      %321 = vadd.xlane.f32.xlu0 %v308
      %v322 = vpop.xlane.xlu0 %321
      %323 = vadd.xlane.f32.xlu0 %v309
      %v324 = vpop.xlane.xlu0 %323
      %325 = vadd.xlane.f32.xlu0 %v310
      %v326 = vpop.xlane.xlu0 %325
      %v327 = vmul.f32 %v312, %v286
      %v328 = vmul.f32 %v314, %v286
      %v329 = vmul.f32 %v316, %v286
      %v330 = vmul.f32 %v318, %v286
      %v331 = vmul.f32 %v320, %v286
      %v332 = vmul.f32 %v322, %v286
      %v333 = vmul.f32 %v324, %v286
      %v334 = vmul.f32 %v326, %v286
      %v335 = vadd.f32 %v327, 1e-05
      %v336 = vadd.f32 %v328, 1e-05
      %v337 = vadd.f32 %v329, 1e-05
      %v338 = vadd.f32 %v330, 1e-05
      %v339 = vadd.f32 %v331, 1e-05
      %v340 = vadd.f32 %v332, 1e-05
      %v341 = vadd.f32 %v333, 1e-05
      %v342 = vadd.f32 %v334, 1e-05
      %v343 = vrsqrt.pop %v335
      %v344 = vrsqrt.pop %v336
      %v345 = vrsqrt.pop %v337
      %v346 = vrsqrt.pop %v338
      %v347 = vrsqrt.pop %v339
      %v348 = vrsqrt.pop %v340
      %v349 = vrsqrt.pop %v341
      %v350 = vrsqrt.pop %v342
      %v351 = vmul.f32 %v295, %v343
      %v352 = vmul.f32 %v296, %v344
      %v353 = vmul.f32 %v297, %v345
      %v354 = vmul.f32 %v298, %v346
      %v355 = vmul.f32 %v299, %v347
      %v356 = vmul.f32 %v300, %v348
      %v357 = vmul.f32 %v301, %v349
      %v358 = vmul.f32 %v302, %v350
      %v359 = vld [vmem:[%s4] sm:$0x1]
      %v361 = vlaneseq
      %v362 = vshrl.u32 %v361, 7
      %v363 = vsub.s32 0, %v362
      %v364 = vrot.slane %v359, %v363
      %v366 = vmul.f32 %v351, %v364
      %v367 = vmul.f32 %v352, %v364
      %v368 = vmul.f32 %v353, %v364
      %v369 = vmul.f32 %v354, %v364
      %v370 = vmul.f32 %v355, %v364
      %v371 = vmul.f32 %v356, %v364
      %v372 = vmul.f32 %v357, %v364
      %v373 = vmul.f32 %v358, %v364
      %v374 = vld [vmem:[%s5] sm:$0x1]
      %v376 = vlaneseq
      %v377 = vshrl.u32 %v376, 7
      %v378 = vsub.s32 0, %v377
      %v379 = vrot.slane %v374, %v378
      %v381 = vadd.f32 %v366, %v379
      %v382 = vadd.f32 %v367, %v379
      %v383 = vadd.f32 %v368, %v379
      %v384 = vadd.f32 %v369, %v379
      %v385 = vadd.f32 %v370, %v379
      %v386 = vadd.f32 %v371, %v379
      %v387 = vadd.f32 %v372, %v379
      %v388 = vadd.f32 %v373, %v379
      %v389 = vld [vmem:[%s1] sm:$0xf]
      %v390 = vld [vmem:[%s1 + $0x4] sm:$0xf]
      %v391 = vld [vmem:[%s1 + $0x8] sm:$0xf]
      %v392 = vld [vmem:[%s1 + $0xc] sm:$0xf]
      %v393 = vld [vmem:[%s1 + $0x10] sm:$0xf]
      %v394 = vld [vmem:[%s1 + $0x14] sm:$0xf]
      %v395 = vld [vmem:[%s1 + $0x18] sm:$0xf]
      %v396 = vld [vmem:[%s1 + $0x1c] sm:$0xf]
      %v397 = vld [vmem:[%s1 + $0x20] sm:$0xf]
      %v398 = vld [vmem:[%s1 + $0x24] sm:$0xf]
      %v399 = vld [vmem:[%s1 + $0x28] sm:$0xf]
      %v400 = vld [vmem:[%s1 + $0x2c] sm:$0xf]
      %v401 = vld [vmem:[%s1 + $0x30] sm:$0xf]
      %v402 = vld [vmem:[%s1 + $0x34] sm:$0xf]
      %v403 = vld [vmem:[%s1 + $0x38] sm:$0xf]
      %v404 = vld [vmem:[%s1 + $0x3c] sm:$0xf]
      %v405 = vld [vmem:[%s2] sm:$0xf]
      %v406 = vld [vmem:[%s2 + $0x4] sm:$0xf]
      %v407 = vld [vmem:[%s2 + $0x8] sm:$0xf]
      %v408 = vld [vmem:[%s2 + $0xc] sm:$0xf]
      %v409 = vld [vmem:[%s2 + $0x10] sm:$0xf]
      %v410 = vld [vmem:[%s2 + $0x14] sm:$0xf]
      %v411 = vld [vmem:[%s2 + $0x18] sm:$0xf]
      %v412 = vld [vmem:[%s2 + $0x1c] sm:$0xf]
      %v413 = vld [vmem:[%s2 + $0x20] sm:$0xf]
      %v414 = vld [vmem:[%s2 + $0x24] sm:$0xf]
      %v415 = vld [vmem:[%s2 + $0x28] sm:$0xf]
      %v416 = vld [vmem:[%s2 + $0x2c] sm:$0xf]
      %v417 = vld [vmem:[%s2 + $0x30] sm:$0xf]
      %v418 = vld [vmem:[%s2 + $0x34] sm:$0xf]
      %v419 = vld [vmem:[%s2 + $0x38] sm:$0xf]
      %v420 = vld [vmem:[%s2 + $0x3c] sm:$0xf]
      %v421 = vld [vmem:[%s3] sm:$0x1]
      %v422 = vpack.c.bf16 %v382, %v381
      %v423 = vpack.c.bf16 %v384, %v383
      %v424 = vpack.c.bf16 %v386, %v385
      %v425 = vpack.c.bf16 %v388, %v387
      %v427 = vlaneseq
      %v428 = vshrl.u32 %v427, 7
      %v429 = vsub.s32 0, %v428
      %v430 = vrot.slane %v421, %v429
      %v448 = vunpack.c.l.b16 %v389
      %v449 = vunpack.c.l.b16 %v390
      %v450 = vunpack.c.l.b16 %v391
      %v451 = vunpack.c.l.b16 %v392
      %v452 = vunpack.c.l.b16 %v393
      %v453 = vunpack.c.l.b16 %v394
      %v454 = vunpack.c.l.b16 %v395
      %v455 = vunpack.c.l.b16 %v396
      %v456 = vunpack.c.l.b16 %v397
      %v457 = vunpack.c.l.b16 %v398
      %v458 = vunpack.c.l.b16 %v399
      %v459 = vunpack.c.l.b16 %v400
      %v460 = vunpack.c.l.b16 %v401
      %v461 = vunpack.c.l.b16 %v402
      %v462 = vunpack.c.l.b16 %v403
      %v463 = vunpack.c.l.b16 %v404
      %v464 = vpack.c.b16 %v449, %v448
      %v465 = vpack.c.b16 %v451, %v450
      %v466 = vpack.c.b16 %v453, %v452
      %v467 = vpack.c.b16 %v455, %v454
      %v468 = vpack.c.b16 %v457, %v456
      %v469 = vpack.c.b16 %v459, %v458
      %v470 = vpack.c.b16 %v461, %v460
      %v471 = vpack.c.b16 %v463, %v462
      %480 = vmatprep.subr.bf16.mxu0 0
      %481 = vmatpush1.bf16.xpose.msra.mxu0 %v471
      %482 = vmatprep.subr.bf16.mxu0 0
      %483 = vmatpush1.bf16.xpose.msra.mxu0 %v470
      %484 = vmatprep.subr.bf16.mxu0 0
      %485 = vmatpush1.bf16.xpose.msra.mxu0 %v469
      %486 = vmatprep.subr.bf16.mxu0 0
      %487 = vmatpush1.bf16.xpose.msra.mxu0 %v468
      %488 = vmatprep.subr.bf16.mxu0 0
      %489 = vmatpush1.bf16.xpose.msra.mxu0 %v467
      %490 = vmatprep.subr.bf16.mxu0 0
      %491 = vmatpush1.bf16.xpose.msra.mxu0 %v466
      %492 = vmatprep.subr.bf16.mxu0 0
      %493 = vmatpush1.bf16.xpose.msra.mxu0 %v465
      %494 = vmatprep.subr.bf16.mxu0 0
      %495 = vmatpush1.bf16.xpose.msra.mxu0 %v464
      %496 = vmatprep.subr.bf16.mxu0 0
      %497 = vmatpush2.bf16.xpose.msra.mxu0 0
      %498 = vmatprep.subr.bf16.mxu0 0
      %499 = vmatpush2.bf16.xpose.msra.mxu0 0
      %500 = vmatprep.subr.bf16.mxu0 0
      %501 = vmatpush2.bf16.xpose.msra.mxu0 0
      %502 = vmatprep.subr.bf16.mxu0 0
      %503 = vmatpush2.bf16.xpose.msra.mxu0 0
      %504 = vmatprep.subr.bf16.mxu0 0
      %505 = vmatpush2.bf16.xpose.msra.mxu0 0
      %506 = vmatprep.subr.bf16.mxu0 0
      %507 = vmatpush2.bf16.xpose.msra.mxu0 0
      %508 = vmatprep.subr.bf16.mxu0 0
      %509 = vmatpush2.bf16.xpose.msra.mxu0 0
      %510 = vmatprep.subr.bf16.mxu0 0
      %511 = vmatpush2.bf16.xpose.msra.mxu0 0
      %512 = vmatprep.mubr.bf16.mxu0 0
      %513 = vmatmul.mubr.bf16.gmra.mxu0 %v422
      %v514 = vpop.f32.mrf.mxu0
      %v515 = vadd.f32 %v430, %v514
      %v516 = vpop.f32.mrf.mxu0
      %v517 = vpop.f32.mrf.mxu0
      %v518 = vadd.f32 %v430, %v517
      %v519 = vpop.f32.mrf.mxu0
      %520 = vmatprep.mubr.bf16.mxu0 0
      %521 = vmatmul.mubr.bf16.gmra.mxu0 %v423
      %v522 = vpop.f32.mrf.mxu0
      %v523 = vadd.f32 %v430, %v522
      %v524 = vpop.f32.mrf.mxu0
      %v525 = vpop.f32.mrf.mxu0
      %v526 = vadd.f32 %v430, %v525
      %v527 = vpop.f32.mrf.mxu0
      %528 = vmatprep.mubr.bf16.mxu0 0
      %529 = vmatmul.mubr.bf16.gmra.mxu0 %v424
      %v530 = vpop.f32.mrf.mxu0
      %v531 = vadd.f32 %v430, %v530
      %v532 = vpop.f32.mrf.mxu0
      %v533 = vpop.f32.mrf.mxu0
      %v534 = vadd.f32 %v430, %v533
      %v535 = vpop.f32.mrf.mxu0
      %536 = vmatprep.mubr.bf16.mxu0 0
      %537 = vmatmul.mubr.bf16.gmra.mxu0 %v425
      %v538 = vpop.f32.mrf.mxu0
      %v539 = vadd.f32 %v430, %v538
      %v540 = vpop.f32.mrf.mxu0
      %v541 = vpop.f32.mrf.mxu0
      %v542 = vadd.f32 %v430, %v541
      %v543 = vpop.f32.mrf.mxu0
      %544 = vdwg.mxu0
      %545 = vst [vmem:[%s253] sm:$0xff] %v515
      %546 = vst [vmem:[%s253 + $0x8] sm:$0xff] %v518
      %547 = vst [vmem:[%s253 + $0x10] sm:$0xff] %v523
      %548 = vst [vmem:[%s253 + $0x18] sm:$0xff] %v526
      %549 = vst [vmem:[%s253 + $0x20] sm:$0xff] %v531
      %550 = vst [vmem:[%s253 + $0x28] sm:$0xff] %v534
      %551 = vst [vmem:[%s253 + $0x30] sm:$0xff] %v539
      %552 = vst [vmem:[%s253 + $0x38] sm:$0xff] %v542
      %v553 = vld [vmem:[#allocation2] sm:$0xff]
      %v554 = vld [vmem:[%s253] sm:$0xff]
      %v555 = vpack.c.bf16 %v553, %v553
      %v572 = vunpack.c.l.b16 %v405
      %v573 = vunpack.c.l.b16 %v406
      %v574 = vunpack.c.l.b16 %v407
      %v575 = vunpack.c.l.b16 %v408
      %v576 = vunpack.c.l.b16 %v409
      %v577 = vunpack.c.l.b16 %v410
      %v578 = vunpack.c.l.b16 %v411
      %v579 = vunpack.c.l.b16 %v412
      %v580 = vunpack.c.l.b16 %v413
      %v581 = vunpack.c.l.b16 %v414
      %v582 = vunpack.c.l.b16 %v415
      %v583 = vunpack.c.l.b16 %v416
      %v584 = vunpack.c.l.b16 %v417
      %v585 = vunpack.c.l.b16 %v418
      %v586 = vunpack.c.l.b16 %v419
      %v587 = vunpack.c.l.b16 %v420
      %v588 = vpack.c.b16 %v573, %v572
      %v589 = vpack.c.b16 %v575, %v574
      %v590 = vpack.c.b16 %v577, %v576
      %v591 = vpack.c.b16 %v579, %v578
      %v592 = vpack.c.b16 %v581, %v580
      %v593 = vpack.c.b16 %v583, %v582
      %v594 = vpack.c.b16 %v585, %v584
      %v595 = vpack.c.b16 %v587, %v586
      %604 = vmatprep.subr.bf16.mxu0 0
      %605 = vmatpush1.bf16.xpose.msra.mxu0 %v595
      %606 = vmatprep.subr.bf16.mxu0 0
      %607 = vmatpush1.bf16.xpose.msra.mxu0 %v594
      %608 = vmatprep.subr.bf16.mxu0 0
      %609 = vmatpush1.bf16.xpose.msra.mxu0 %v593
      %610 = vmatprep.subr.bf16.mxu0 0
      %611 = vmatpush1.bf16.xpose.msra.mxu0 %v592
      %612 = vmatprep.subr.bf16.mxu0 0
      %613 = vmatpush1.bf16.xpose.msra.mxu0 %v591
      %614 = vmatprep.subr.bf16.mxu0 0
      %615 = vmatpush1.bf16.xpose.msra.mxu0 %v590
      %616 = vmatprep.subr.bf16.mxu0 0
      %617 = vmatpush1.bf16.xpose.msra.mxu0 %v589
      %618 = vmatprep.subr.bf16.mxu0 0
      %619 = vmatpush1.bf16.xpose.msra.mxu0 %v588
      %620 = vmatprep.subr.bf16.mxu0 0
      %621 = vmatpush2.bf16.xpose.msra.mxu0 0
      %622 = vmatprep.subr.bf16.mxu0 0
      %623 = vmatpush2.bf16.xpose.msra.mxu0 0
      %624 = vmatprep.subr.bf16.mxu0 0
      %625 = vmatpush2.bf16.xpose.msra.mxu0 0
      %626 = vmatprep.subr.bf16.mxu0 0
      %627 = vmatpush2.bf16.xpose.msra.mxu0 0
      %628 = vmatprep.subr.bf16.mxu0 0
      %629 = vmatpush2.bf16.xpose.msra.mxu0 0
      %630 = vmatprep.subr.bf16.mxu0 0
      %631 = vmatpush2.bf16.xpose.msra.mxu0 0
      %632 = vmatprep.subr.bf16.mxu0 0
      %633 = vmatpush2.bf16.xpose.msra.mxu0 0
      %634 = vmatprep.subr.bf16.mxu0 0
      %635 = vmatpush2.bf16.xpose.msra.mxu0 0
      %636 = vmatprep.mubr.bf16.mxu0 0
      %637 = vmatmul.mubr.bf16.gmra.mxu0 %v555
      %v638 = vpop.f32.mrf.mxu0
      %v639 = vadd.f32 0.0, %v638
      %v640 = vpop.f32.mrf.mxu0
      %v641 = vpop.f32.mrf.mxu0
      %v642 = vpop.f32.mrf.mxu0
      %643 = vdwg.mxu0
      %v644 = vadd.f32 %v554, %v639
      %v645 = vtanh.pop %v644
      %646 = vst [vmem:[%s253] sm:$0xff] %v645
      %s647 = scalar_lea.vmem %s253, 8
      %v648 = vld [vmem:[%s647] sm:$0xff]
      %v649 = vpack.c.bf16 %v645, %v645
      %650 = vmatprep.subr.bf16.mxu0 0
      %651 = vmatpush1.bf16.xpose.msra.mxu0 %v595
      %652 = vmatprep.subr.bf16.mxu0 0
      %653 = vmatpush1.bf16.xpose.msra.mxu0 %v594
      %654 = vmatprep.subr.bf16.mxu0 0
      %655 = vmatpush1.bf16.xpose.msra.mxu0 %v593
      %656 = vmatprep.subr.bf16.mxu0 0
      %657 = vmatpush1.bf16.xpose.msra.mxu0 %v592
      %658 = vmatprep.subr.bf16.mxu0 0
      %659 = vmatpush1.bf16.xpose.msra.mxu0 %v591
      %660 = vmatprep.subr.bf16.mxu0 0
      %661 = vmatpush1.bf16.xpose.msra.mxu0 %v590
      %662 = vmatprep.subr.bf16.mxu0 0
      %663 = vmatpush1.bf16.xpose.msra.mxu0 %v589
      %664 = vmatprep.subr.bf16.mxu0 0
      %665 = vmatpush1.bf16.xpose.msra.mxu0 %v588
      %666 = vmatprep.subr.bf16.mxu0 0
      %667 = vmatpush2.bf16.xpose.msra.mxu0 0
      %668 = vmatprep.subr.bf16.mxu0 0
      %669 = vmatpush2.bf16.xpose.msra.mxu0 0
      %670 = vmatprep.subr.bf16.mxu0 0
      %671 = vmatpush2.bf16.xpose.msra.mxu0 0
      %672 = vmatprep.subr.bf16.mxu0 0
      %673 = vmatpush2.bf16.xpose.msra.mxu0 0
      %674 = vmatprep.subr.bf16.mxu0 0
      %675 = vmatpush2.bf16.xpose.msra.mxu0 0
      %676 = vmatprep.subr.bf16.mxu0 0
      %677 = vmatpush2.bf16.xpose.msra.mxu0 0
      %678 = vmatprep.subr.bf16.mxu0 0
      %679 = vmatpush2.bf16.xpose.msra.mxu0 0
      %680 = vmatprep.subr.bf16.mxu0 0
      %681 = vmatpush2.bf16.xpose.msra.mxu0 0
      %682 = vmatprep.mubr.bf16.mxu0 0
      %683 = vmatmul.mubr.bf16.gmra.mxu0 %v649
      %v684 = vpop.f32.mrf.mxu0
      %v685 = vadd.f32 0.0, %v684
      %v686 = vpop.f32.mrf.mxu0
      %v687 = vpop.f32.mrf.mxu0
      %v688 = vpop.f32.mrf.mxu0
      %689 = vdwg.mxu0
      %v690 = vadd.f32 %v648, %v685
      %v691 = vtanh.pop %v690
      %692 = vst [vmem:[%s647] sm:$0xff] %v691
      %s693 = scalar_lea.vmem %s253, 16
      %v694 = vld [vmem:[%s693] sm:$0xff]
      %v695 = vpack.c.bf16 %v691, %v691
      %696 = vmatprep.subr.bf16.mxu0 0
      %697 = vmatpush1.bf16.xpose.msra.mxu0 %v595
      %698 = vmatprep.subr.bf16.mxu0 0
      %699 = vmatpush1.bf16.xpose.msra.mxu0 %v594
      %700 = vmatprep.subr.bf16.mxu0 0
      %701 = vmatpush1.bf16.xpose.msra.mxu0 %v593
      %702 = vmatprep.subr.bf16.mxu0 0
      %703 = vmatpush1.bf16.xpose.msra.mxu0 %v592
      %704 = vmatprep.subr.bf16.mxu0 0
      %705 = vmatpush1.bf16.xpose.msra.mxu0 %v591
      %706 = vmatprep.subr.bf16.mxu0 0
      %707 = vmatpush1.bf16.xpose.msra.mxu0 %v590
      %708 = vmatprep.subr.bf16.mxu0 0
      %709 = vmatpush1.bf16.xpose.msra.mxu0 %v589
      %710 = vmatprep.subr.bf16.mxu0 0
      %711 = vmatpush1.bf16.xpose.msra.mxu0 %v588
      %712 = vmatprep.subr.bf16.mxu0 0
      %713 = vmatpush2.bf16.xpose.msra.mxu0 0
      %714 = vmatprep.subr.bf16.mxu0 0
      %715 = vmatpush2.bf16.xpose.msra.mxu0 0
      %716 = vmatprep.subr.bf16.mxu0 0
      %717 = vmatpush2.bf16.xpose.msra.mxu0 0
      %718 = vmatprep.subr.bf16.mxu0 0
      %719 = vmatpush2.bf16.xpose.msra.mxu0 0
      %720 = vmatprep.subr.bf16.mxu0 0
      %721 = vmatpush2.bf16.xpose.msra.mxu0 0
      %722 = vmatprep.subr.bf16.mxu0 0
      %723 = vmatpush2.bf16.xpose.msra.mxu0 0
      %724 = vmatprep.subr.bf16.mxu0 0
      %725 = vmatpush2.bf16.xpose.msra.mxu0 0
      %726 = vmatprep.subr.bf16.mxu0 0
      %727 = vmatpush2.bf16.xpose.msra.mxu0 0
      %728 = vmatprep.mubr.bf16.mxu0 0
      %729 = vmatmul.mubr.bf16.gmra.mxu0 %v695
      %v730 = vpop.f32.mrf.mxu0
      %v731 = vadd.f32 0.0, %v730
      %v732 = vpop.f32.mrf.mxu0
      %v733 = vpop.f32.mrf.mxu0
      %v734 = vpop.f32.mrf.mxu0
      %735 = vdwg.mxu0
      %v736 = vadd.f32 %v694, %v731
      %v737 = vtanh.pop %v736
      %738 = vst [vmem:[%s693] sm:$0xff] %v737
      %s739 = scalar_lea.vmem %s253, 24
      %v740 = vld [vmem:[%s739] sm:$0xff]
      %v741 = vpack.c.bf16 %v737, %v737
      %742 = vmatprep.subr.bf16.mxu0 0
      %743 = vmatpush1.bf16.xpose.msra.mxu0 %v595
      %744 = vmatprep.subr.bf16.mxu0 0
      %745 = vmatpush1.bf16.xpose.msra.mxu0 %v594
      %746 = vmatprep.subr.bf16.mxu0 0
      %747 = vmatpush1.bf16.xpose.msra.mxu0 %v593
      %748 = vmatprep.subr.bf16.mxu0 0
      %749 = vmatpush1.bf16.xpose.msra.mxu0 %v592
      %750 = vmatprep.subr.bf16.mxu0 0
      %751 = vmatpush1.bf16.xpose.msra.mxu0 %v591
      %752 = vmatprep.subr.bf16.mxu0 0
      %753 = vmatpush1.bf16.xpose.msra.mxu0 %v590
      %754 = vmatprep.subr.bf16.mxu0 0
      %755 = vmatpush1.bf16.xpose.msra.mxu0 %v589
      %756 = vmatprep.subr.bf16.mxu0 0
      %757 = vmatpush1.bf16.xpose.msra.mxu0 %v588
      %758 = vmatprep.subr.bf16.mxu0 0
      %759 = vmatpush2.bf16.xpose.msra.mxu0 0
      %760 = vmatprep.subr.bf16.mxu0 0
      %761 = vmatpush2.bf16.xpose.msra.mxu0 0
      %762 = vmatprep.subr.bf16.mxu0 0
      %763 = vmatpush2.bf16.xpose.msra.mxu0 0
      %764 = vmatprep.subr.bf16.mxu0 0
      %765 = vmatpush2.bf16.xpose.msra.mxu0 0
      %766 = vmatprep.subr.bf16.mxu0 0
      %767 = vmatpush2.bf16.xpose.msra.mxu0 0
      %768 = vmatprep.subr.bf16.mxu0 0
      %769 = vmatpush2.bf16.xpose.msra.mxu0 0
      %770 = vmatprep.subr.bf16.mxu0 0
      %771 = vmatpush2.bf16.xpose.msra.mxu0 0
      %772 = vmatprep.subr.bf16.mxu0 0
      %773 = vmatpush2.bf16.xpose.msra.mxu0 0
      %774 = vmatprep.mubr.bf16.mxu0 0
      %775 = vmatmul.mubr.bf16.gmra.mxu0 %v741
      %v776 = vpop.f32.mrf.mxu0
      %v777 = vadd.f32 0.0, %v776
      %v778 = vpop.f32.mrf.mxu0
      %v779 = vpop.f32.mrf.mxu0
      %v780 = vpop.f32.mrf.mxu0
      %781 = vdwg.mxu0
      %v782 = vadd.f32 %v740, %v777
      %v783 = vtanh.pop %v782
      %784 = vst [vmem:[%s739] sm:$0xff] %v783
      %s785 = scalar_lea.vmem %s253, 32
      %v786 = vld [vmem:[%s785] sm:$0xff]
      %v787 = vpack.c.bf16 %v783, %v783
      %788 = vmatprep.subr.bf16.mxu0 0
      %789 = vmatpush1.bf16.xpose.msra.mxu0 %v595
      %790 = vmatprep.subr.bf16.mxu0 0
      %791 = vmatpush1.bf16.xpose.msra.mxu0 %v594
      %792 = vmatprep.subr.bf16.mxu0 0
      %793 = vmatpush1.bf16.xpose.msra.mxu0 %v593
      %794 = vmatprep.subr.bf16.mxu0 0
      %795 = vmatpush1.bf16.xpose.msra.mxu0 %v592
      %796 = vmatprep.subr.bf16.mxu0 0
      %797 = vmatpush1.bf16.xpose.msra.mxu0 %v591
      %798 = vmatprep.subr.bf16.mxu0 0
      %799 = vmatpush1.bf16.xpose.msra.mxu0 %v590
      %800 = vmatprep.subr.bf16.mxu0 0
      %801 = vmatpush1.bf16.xpose.msra.mxu0 %v589
      %802 = vmatprep.subr.bf16.mxu0 0
      %803 = vmatpush1.bf16.xpose.msra.mxu0 %v588
      %804 = vmatprep.subr.bf16.mxu0 0
      %805 = vmatpush2.bf16.xpose.msra.mxu0 0
      %806 = vmatprep.subr.bf16.mxu0 0
      %807 = vmatpush2.bf16.xpose.msra.mxu0 0
      %808 = vmatprep.subr.bf16.mxu0 0
      %809 = vmatpush2.bf16.xpose.msra.mxu0 0
      %810 = vmatprep.subr.bf16.mxu0 0
      %811 = vmatpush2.bf16.xpose.msra.mxu0 0
      %812 = vmatprep.subr.bf16.mxu0 0
      %813 = vmatpush2.bf16.xpose.msra.mxu0 0
      %814 = vmatprep.subr.bf16.mxu0 0
      %815 = vmatpush2.bf16.xpose.msra.mxu0 0
      %816 = vmatprep.subr.bf16.mxu0 0
      %817 = vmatpush2.bf16.xpose.msra.mxu0 0
      %818 = vmatprep.subr.bf16.mxu0 0
      %819 = vmatpush2.bf16.xpose.msra.mxu0 0
      %820 = vmatprep.mubr.bf16.mxu0 0
      %821 = vmatmul.mubr.bf16.gmra.mxu0 %v787
      %v822 = vpop.f32.mrf.mxu0
      %v823 = vadd.f32 0.0, %v822
      %v824 = vpop.f32.mrf.mxu0
      %v825 = vpop.f32.mrf.mxu0
      %v826 = vpop.f32.mrf.mxu0
      %827 = vdwg.mxu0
      %v828 = vadd.f32 %v786, %v823
      %v829 = vtanh.pop %v828
      %830 = vst [vmem:[%s785] sm:$0xff] %v829
      %s831 = scalar_lea.vmem %s253, 40
      %v832 = vld [vmem:[%s831] sm:$0xff]
      %v833 = vpack.c.bf16 %v829, %v829
      %834 = vmatprep.subr.bf16.mxu0 0
      %835 = vmatpush1.bf16.xpose.msra.mxu0 %v595
      %836 = vmatprep.subr.bf16.mxu0 0
      %837 = vmatpush1.bf16.xpose.msra.mxu0 %v594
      %838 = vmatprep.subr.bf16.mxu0 0
      %839 = vmatpush1.bf16.xpose.msra.mxu0 %v593
      %840 = vmatprep.subr.bf16.mxu0 0
      %841 = vmatpush1.bf16.xpose.msra.mxu0 %v592
      %842 = vmatprep.subr.bf16.mxu0 0
      %843 = vmatpush1.bf16.xpose.msra.mxu0 %v591
      %844 = vmatprep.subr.bf16.mxu0 0
      %845 = vmatpush1.bf16.xpose.msra.mxu0 %v590
      %846 = vmatprep.subr.bf16.mxu0 0
      %847 = vmatpush1.bf16.xpose.msra.mxu0 %v589
      %848 = vmatprep.subr.bf16.mxu0 0
      %849 = vmatpush1.bf16.xpose.msra.mxu0 %v588
      %850 = vmatprep.subr.bf16.mxu0 0
      %851 = vmatpush2.bf16.xpose.msra.mxu0 0
      %852 = vmatprep.subr.bf16.mxu0 0
      %853 = vmatpush2.bf16.xpose.msra.mxu0 0
      %854 = vmatprep.subr.bf16.mxu0 0
      %855 = vmatpush2.bf16.xpose.msra.mxu0 0
      %856 = vmatprep.subr.bf16.mxu0 0
      %857 = vmatpush2.bf16.xpose.msra.mxu0 0
      %858 = vmatprep.subr.bf16.mxu0 0
      %859 = vmatpush2.bf16.xpose.msra.mxu0 0
      %860 = vmatprep.subr.bf16.mxu0 0
      %861 = vmatpush2.bf16.xpose.msra.mxu0 0
      %862 = vmatprep.subr.bf16.mxu0 0
      %863 = vmatpush2.bf16.xpose.msra.mxu0 0
      %864 = vmatprep.subr.bf16.mxu0 0
      %865 = vmatpush2.bf16.xpose.msra.mxu0 0
      %866 = vmatprep.mubr.bf16.mxu0 0
      %867 = vmatmul.mubr.bf16.gmra.mxu0 %v833
      %v868 = vpop.f32.mrf.mxu0
      %v869 = vadd.f32 0.0, %v868
      %v870 = vpop.f32.mrf.mxu0
      %v871 = vpop.f32.mrf.mxu0
      %v872 = vpop.f32.mrf.mxu0
      %873 = vdwg.mxu0
      %v874 = vadd.f32 %v832, %v869
      %v875 = vtanh.pop %v874
      %876 = vst [vmem:[%s831] sm:$0xff] %v875
      %s877 = scalar_lea.vmem %s253, 48
      %v878 = vld [vmem:[%s877] sm:$0xff]
      %v879 = vpack.c.bf16 %v875, %v875
      %880 = vmatprep.subr.bf16.mxu0 0
      %881 = vmatpush1.bf16.xpose.msra.mxu0 %v595
      %882 = vmatprep.subr.bf16.mxu0 0
      %883 = vmatpush1.bf16.xpose.msra.mxu0 %v594
      %884 = vmatprep.subr.bf16.mxu0 0
      %885 = vmatpush1.bf16.xpose.msra.mxu0 %v593
      %886 = vmatprep.subr.bf16.mxu0 0
      %887 = vmatpush1.bf16.xpose.msra.mxu0 %v592
      %888 = vmatprep.subr.bf16.mxu0 0
      %889 = vmatpush1.bf16.xpose.msra.mxu0 %v591
      %890 = vmatprep.subr.bf16.mxu0 0
      %891 = vmatpush1.bf16.xpose.msra.mxu0 %v590
      %892 = vmatprep.subr.bf16.mxu0 0
      %893 = vmatpush1.bf16.xpose.msra.mxu0 %v589
      %894 = vmatprep.subr.bf16.mxu0 0
      %895 = vmatpush1.bf16.xpose.msra.mxu0 %v588
      %896 = vmatprep.subr.bf16.mxu0 0
      %897 = vmatpush2.bf16.xpose.msra.mxu0 0
      %898 = vmatprep.subr.bf16.mxu0 0
      %899 = vmatpush2.bf16.xpose.msra.mxu0 0
      %900 = vmatprep.subr.bf16.mxu0 0
      %901 = vmatpush2.bf16.xpose.msra.mxu0 0
      %902 = vmatprep.subr.bf16.mxu0 0
      %903 = vmatpush2.bf16.xpose.msra.mxu0 0
      %904 = vmatprep.subr.bf16.mxu0 0
      %905 = vmatpush2.bf16.xpose.msra.mxu0 0
      %906 = vmatprep.subr.bf16.mxu0 0
      %907 = vmatpush2.bf16.xpose.msra.mxu0 0
      %908 = vmatprep.subr.bf16.mxu0 0
      %909 = vmatpush2.bf16.xpose.msra.mxu0 0
      %910 = vmatprep.subr.bf16.mxu0 0
      %911 = vmatpush2.bf16.xpose.msra.mxu0 0
      %912 = vmatprep.mubr.bf16.mxu0 0
      %913 = vmatmul.mubr.bf16.gmra.mxu0 %v879
      %v914 = vpop.f32.mrf.mxu0
      %v915 = vadd.f32 0.0, %v914
      %v916 = vpop.f32.mrf.mxu0
      %v917 = vpop.f32.mrf.mxu0
      %v918 = vpop.f32.mrf.mxu0
      %919 = vdwg.mxu0
      %v920 = vadd.f32 %v878, %v915
      %v921 = vtanh.pop %v920
      %922 = vst [vmem:[%s877] sm:$0xff] %v921
      %s923 = scalar_lea.vmem %s253, 56
      %v924 = vld [vmem:[%s923] sm:$0xff]
      %v925 = vpack.c.bf16 %v921, %v921
      %926 = vmatprep.subr.bf16.mxu0 0
      %927 = vmatpush1.bf16.xpose.msra.mxu0 %v595
      %928 = vmatprep.subr.bf16.mxu0 0
      %929 = vmatpush1.bf16.xpose.msra.mxu0 %v594
      %930 = vmatprep.subr.bf16.mxu0 0
      %931 = vmatpush1.bf16.xpose.msra.mxu0 %v593
      %932 = vmatprep.subr.bf16.mxu0 0
      %933 = vmatpush1.bf16.xpose.msra.mxu0 %v592
      %934 = vmatprep.subr.bf16.mxu0 0
      %935 = vmatpush1.bf16.xpose.msra.mxu0 %v591
      %936 = vmatprep.subr.bf16.mxu0 0
      %937 = vmatpush1.bf16.xpose.msra.mxu0 %v590
      %938 = vmatprep.subr.bf16.mxu0 0
      %939 = vmatpush1.bf16.xpose.msra.mxu0 %v589
      %940 = vmatprep.subr.bf16.mxu0 0
      %941 = vmatpush1.bf16.xpose.msra.mxu0 %v588
      %942 = vmatprep.subr.bf16.mxu0 0
      %943 = vmatpush2.bf16.xpose.msra.mxu0 0
      %944 = vmatprep.subr.bf16.mxu0 0
      %945 = vmatpush2.bf16.xpose.msra.mxu0 0
      %946 = vmatprep.subr.bf16.mxu0 0
      %947 = vmatpush2.bf16.xpose.msra.mxu0 0
      %948 = vmatprep.subr.bf16.mxu0 0
      %949 = vmatpush2.bf16.xpose.msra.mxu0 0
      %950 = vmatprep.subr.bf16.mxu0 0
      %951 = vmatpush2.bf16.xpose.msra.mxu0 0
      %952 = vmatprep.subr.bf16.mxu0 0
      %953 = vmatpush2.bf16.xpose.msra.mxu0 0
      %954 = vmatprep.subr.bf16.mxu0 0
      %955 = vmatpush2.bf16.xpose.msra.mxu0 0
      %956 = vmatprep.subr.bf16.mxu0 0
      %957 = vmatpush2.bf16.xpose.msra.mxu0 0
      %958 = vmatprep.mubr.bf16.mxu0 0
      %959 = vmatmul.mubr.bf16.gmra.mxu0 %v925
      %v960 = vpop.f32.mrf.mxu0
      %v961 = vadd.f32 0.0, %v960
      %v962 = vpop.f32.mrf.mxu0
      %v963 = vpop.f32.mrf.mxu0
      %v964 = vpop.f32.mrf.mxu0
      %965 = vdwg.mxu0
      %v966 = vadd.f32 %v924, %v961
      %v967 = vtanh.pop %v966
      %968 = vst [vmem:[%s923] sm:$0xff] %v967
      %969 = vst [vmem:[#allocation2] sm:$0xff] %v967
      %s970 = scalar_lea.vmem %s1, 64
      %v971 = vld [vmem:[%s970] sm:$0xf]
      %v972 = vld [vmem:[%s970 + $0x4] sm:$0xf]
      %v973 = vld [vmem:[%s970 + $0x8] sm:$0xf]
      %v974 = vld [vmem:[%s970 + $0xc] sm:$0xf]
      %v975 = vld [vmem:[%s970 + $0x10] sm:$0xf]
      %v976 = vld [vmem:[%s970 + $0x14] sm:$0xf]
      %v977 = vld [vmem:[%s970 + $0x18] sm:$0xf]
      %v978 = vld [vmem:[%s970 + $0x1c] sm:$0xf]
      %v979 = vld [vmem:[%s970 + $0x20] sm:$0xf]
      %v980 = vld [vmem:[%s970 + $0x24] sm:$0xf]
      %v981 = vld [vmem:[%s970 + $0x28] sm:$0xf]
      %v982 = vld [vmem:[%s970 + $0x2c] sm:$0xf]
      %v983 = vld [vmem:[%s970 + $0x30] sm:$0xf]
      %v984 = vld [vmem:[%s970 + $0x34] sm:$0xf]
      %v985 = vld [vmem:[%s970 + $0x38] sm:$0xf]
      %v986 = vld [vmem:[%s970 + $0x3c] sm:$0xf]
      %s987 = scalar_lea.vmem %s2, 64
      %v988 = vld [vmem:[%s987] sm:$0xf]
      %v989 = vld [vmem:[%s987 + $0x4] sm:$0xf]
      %v990 = vld [vmem:[%s987 + $0x8] sm:$0xf]
      %v991 = vld [vmem:[%s987 + $0xc] sm:$0xf]
      %v992 = vld [vmem:[%s987 + $0x10] sm:$0xf]
      %v993 = vld [vmem:[%s987 + $0x14] sm:$0xf]
      %v994 = vld [vmem:[%s987 + $0x18] sm:$0xf]
      %v995 = vld [vmem:[%s987 + $0x1c] sm:$0xf]
      %v996 = vld [vmem:[%s987 + $0x20] sm:$0xf]
      %v997 = vld [vmem:[%s987 + $0x24] sm:$0xf]
      %v998 = vld [vmem:[%s987 + $0x28] sm:$0xf]
      %v999 = vld [vmem:[%s987 + $0x2c] sm:$0xf]
      %v1000 = vld [vmem:[%s987 + $0x30] sm:$0xf]
      %v1001 = vld [vmem:[%s987 + $0x34] sm:$0xf]
      %v1002 = vld [vmem:[%s987 + $0x38] sm:$0xf]
      %v1003 = vld [vmem:[%s987 + $0x3c] sm:$0xf]
      %s1004 = scalar_lea.vmem %s3, 1
      %v1005 = vld [vmem:[%s1004] sm:$0x1]
      %v1006 = vld [vmem:[%s253] sm:$0xff]
      %v1007 = vld [vmem:[%s253 + $0x8] sm:$0xff]
      %v1008 = vld [vmem:[%s253 + $0x10] sm:$0xff]
      %v1009 = vld [vmem:[%s253 + $0x18] sm:$0xff]
      %v1010 = vld [vmem:[%s253 + $0x20] sm:$0xff]
      %v1011 = vld [vmem:[%s253 + $0x28] sm:$0xff]
      %v1012 = vld [vmem:[%s253 + $0x30] sm:$0xff]
      %v1013 = vld [vmem:[%s253 + $0x38] sm:$0xff]
      %v1014 = vpack.c.bf16 %v1007, %v1006
      %v1015 = vpack.c.bf16 %v1009, %v1008
      %v1016 = vpack.c.bf16 %v1011, %v1010
      %v1017 = vpack.c.bf16 %v1013, %v1012
      %v1019 = vlaneseq
      %v1020 = vshrl.u32 %v1019, 7
      %v1021 = vsub.s32 0, %v1020
      %v1022 = vrot.slane %v1005, %v1021
      %v1040 = vunpack.c.l.b16 %v971
      %v1041 = vunpack.c.l.b16 %v972
      %v1042 = vunpack.c.l.b16 %v973
      %v1043 = vunpack.c.l.b16 %v974
      %v1044 = vunpack.c.l.b16 %v975
      %v1045 = vunpack.c.l.b16 %v976
      %v1046 = vunpack.c.l.b16 %v977
      %v1047 = vunpack.c.l.b16 %v978
      %v1048 = vunpack.c.l.b16 %v979
      %v1049 = vunpack.c.l.b16 %v980
      %v1050 = vunpack.c.l.b16 %v981
      %v1051 = vunpack.c.l.b16 %v982
      %v1052 = vunpack.c.l.b16 %v983
      %v1053 = vunpack.c.l.b16 %v984
      %v1054 = vunpack.c.l.b16 %v985
      %v1055 = vunpack.c.l.b16 %v986
      %v1056 = vpack.c.b16 %v1041, %v1040
      %v1057 = vpack.c.b16 %v1043, %v1042
      %v1058 = vpack.c.b16 %v1045, %v1044
      %v1059 = vpack.c.b16 %v1047, %v1046
      %v1060 = vpack.c.b16 %v1049, %v1048
      %v1061 = vpack.c.b16 %v1051, %v1050
      %v1062 = vpack.c.b16 %v1053, %v1052
      %v1063 = vpack.c.b16 %v1055, %v1054
      %1072 = vmatprep.subr.bf16.mxu0 0
      %1073 = vmatpush1.bf16.xpose.msra.mxu0 %v1063
      %1074 = vmatprep.subr.bf16.mxu0 0
      %1075 = vmatpush1.bf16.xpose.msra.mxu0 %v1062
      %1076 = vmatprep.subr.bf16.mxu0 0
      %1077 = vmatpush1.bf16.xpose.msra.mxu0 %v1061
      %1078 = vmatprep.subr.bf16.mxu0 0
      %1079 = vmatpush1.bf16.xpose.msra.mxu0 %v1060
      %1080 = vmatprep.subr.bf16.mxu0 0
      %1081 = vmatpush1.bf16.xpose.msra.mxu0 %v1059
      %1082 = vmatprep.subr.bf16.mxu0 0
      %1083 = vmatpush1.bf16.xpose.msra.mxu0 %v1058
      %1084 = vmatprep.subr.bf16.mxu0 0
      %1085 = vmatpush1.bf16.xpose.msra.mxu0 %v1057
      %1086 = vmatprep.subr.bf16.mxu0 0
      %1087 = vmatpush1.bf16.xpose.msra.mxu0 %v1056
      %1088 = vmatprep.subr.bf16.mxu0 0
      %1089 = vmatpush2.bf16.xpose.msra.mxu0 0
      %1090 = vmatprep.subr.bf16.mxu0 0
      %1091 = vmatpush2.bf16.xpose.msra.mxu0 0
      %1092 = vmatprep.subr.bf16.mxu0 0
      %1093 = vmatpush2.bf16.xpose.msra.mxu0 0
      %1094 = vmatprep.subr.bf16.mxu0 0
      %1095 = vmatpush2.bf16.xpose.msra.mxu0 0
      %1096 = vmatprep.subr.bf16.mxu0 0
      %1097 = vmatpush2.bf16.xpose.msra.mxu0 0
      %1098 = vmatprep.subr.bf16.mxu0 0
      %1099 = vmatpush2.bf16.xpose.msra.mxu0 0
      %1100 = vmatprep.subr.bf16.mxu0 0
      %1101 = vmatpush2.bf16.xpose.msra.mxu0 0
      %1102 = vmatprep.subr.bf16.mxu0 0
      %1103 = vmatpush2.bf16.xpose.msra.mxu0 0
      %1104 = vmatprep.mubr.bf16.mxu0 0
      %1105 = vmatmul.mubr.bf16.gmra.mxu0 %v1014
      %v1106 = vpop.f32.mrf.mxu0
      %v1107 = vadd.f32 %v1022, %v1106
      %v1108 = vpop.f32.mrf.mxu0
      %v1109 = vpop.f32.mrf.mxu0
      %v1110 = vadd.f32 %v1022, %v1109
      %v1111 = vpop.f32.mrf.mxu0
      %1112 = vmatprep.mubr.bf16.mxu0 0
      %1113 = vmatmul.mubr.bf16.gmra.mxu0 %v1015
      %v1114 = vpop.f32.mrf.mxu0
      %v1115 = vadd.f32 %v1022, %v1114
      %v1116 = vpop.f32.mrf.mxu0
      %v1117 = vpop.f32.mrf.mxu0
      %v1118 = vadd.f32 %v1022, %v1117
      %v1119 = vpop.f32.mrf.mxu0
      %1120 = vmatprep.mubr.bf16.mxu0 0
      %1121 = vmatmul.mubr.bf16.gmra.mxu0 %v1016
      %v1122 = vpop.f32.mrf.mxu0
      %v1123 = vadd.f32 %v1022, %v1122
      %v1124 = vpop.f32.mrf.mxu0
      %v1125 = vpop.f32.mrf.mxu0
      %v1126 = vadd.f32 %v1022, %v1125
      %v1127 = vpop.f32.mrf.mxu0
      %1128 = vmatprep.mubr.bf16.mxu0 0
      %1129 = vmatmul.mubr.bf16.gmra.mxu0 %v1017
      %v1130 = vpop.f32.mrf.mxu0
      %v1131 = vadd.f32 %v1022, %v1130
      %v1132 = vpop.f32.mrf.mxu0
      %v1133 = vpop.f32.mrf.mxu0
      %v1134 = vadd.f32 %v1022, %v1133
      %v1135 = vpop.f32.mrf.mxu0
      %1136 = vdwg.mxu0
      %1137 = vst [vmem:[%s253] sm:$0xff] %v1107
      %1138 = vst [vmem:[%s253 + $0x8] sm:$0xff] %v1110
      %1139 = vst [vmem:[%s253 + $0x10] sm:$0xff] %v1115
      %1140 = vst [vmem:[%s253 + $0x18] sm:$0xff] %v1118
      %1141 = vst [vmem:[%s253 + $0x20] sm:$0xff] %v1123
      %1142 = vst [vmem:[%s253 + $0x28] sm:$0xff] %v1126
      %1143 = vst [vmem:[%s253 + $0x30] sm:$0xff] %v1131
      %1144 = vst [vmem:[%s253 + $0x38] sm:$0xff] %v1134
      %s1145 = scalar_lea.vmem [#allocation2], 8
      %v1146 = vld [vmem:[%s1145] sm:$0xff]
      %v1147 = vld [vmem:[%s253] sm:$0xff]
      %v1148 = vpack.c.bf16 %v1146, %v1146
      %v1165 = vunpack.c.l.b16 %v988
      %v1166 = vunpack.c.l.b16 %v989
      %v1167 = vunpack.c.l.b16 %v990
      %v1168 = vunpack.c.l.b16 %v991
      %v1169 = vunpack.c.l.b16 %v992
      %v1170 = vunpack.c.l.b16 %v993
      %v1171 = vunpack.c.l.b16 %v994
      %v1172 = vunpack.c.l.b16 %v995
      %v1173 = vunpack.c.l.b16 %v996
      %v1174 = vunpack.c.l.b16 %v997
      %v1175 = vunpack.c.l.b16 %v998
      %v1176 = vunpack.c.l.b16 %v999
      %v1177 = vunpack.c.l.b16 %v1000
      %v1178 = vunpack.c.l.b16 %v1001
      %v1179 = vunpack.c.l.b16 %v1002
      %v1180 = vunpack.c.l.b16 %v1003
      %v1181 = vpack.c.b16 %v1166, %v1165
      %v1182 = vpack.c.b16 %v1168, %v1167
      %v1183 = vpack.c.b16 %v1170, %v1169
      %v1184 = vpack.c.b16 %v1172, %v1171
      %v1185 = vpack.c.b16 %v1174, %v1173
      %v1186 = vpack.c.b16 %v1176, %v1175
      %v1187 = vpack.c.b16 %v1178, %v1177
      %v1188 = vpack.c.b16 %v1180, %v1179
      %1197 = vmatprep.subr.bf16.mxu0 0
      %1198 = vmatpush1.bf16.xpose.msra.mxu0 %v1188
      %1199 = vmatprep.subr.bf16.mxu0 0
      %1200 = vmatpush1.bf16.xpose.msra.mxu0 %v1187
      %1201 = vmatprep.subr.bf16.mxu0 0
      %1202 = vmatpush1.bf16.xpose.msra.mxu0 %v1186
      %1203 = vmatprep.subr.bf16.mxu0 0
      %1204 = vmatpush1.bf16.xpose.msra.mxu0 %v1185
      %1205 = vmatprep.subr.bf16.mxu0 0
      %1206 = vmatpush1.bf16.xpose.msra.mxu0 %v1184
      %1207 = vmatprep.subr.bf16.mxu0 0
      %1208 = vmatpush1.bf16.xpose.msra.mxu0 %v1183
      %1209 = vmatprep.subr.bf16.mxu0 0
      %1210 = vmatpush1.bf16.xpose.msra.mxu0 %v1182
      %1211 = vmatprep.subr.bf16.mxu0 0
      %1212 = vmatpush1.bf16.xpose.msra.mxu0 %v1181
      %1213 = vmatprep.subr.bf16.mxu0 0
      %1214 = vmatpush2.bf16.xpose.msra.mxu0 0
      %1215 = vmatprep.subr.bf16.mxu0 0
      %1216 = vmatpush2.bf16.xpose.msra.mxu0 0
      %1217 = vmatprep.subr.bf16.mxu0 0
      %1218 = vmatpush2.bf16.xpose.msra.mxu0 0
      %1219 = vmatprep.subr.bf16.mxu0 0
      %1220 = vmatpush2.bf16.xpose.msra.mxu0 0
      %1221 = vmatprep.subr.bf16.mxu0 0
      %1222 = vmatpush2.bf16.xpose.msra.mxu0 0
      %1223 = vmatprep.subr.bf16.mxu0 0
      %1224 = vmatpush2.bf16.xpose.msra.mxu0 0
      %1225 = vmatprep.subr.bf16.mxu0 0
      %1226 = vmatpush2.bf16.xpose.msra.mxu0 0
      %1227 = vmatprep.subr.bf16.mxu0 0
      %1228 = vmatpush2.bf16.xpose.msra.mxu0 0
      %1229 = vmatprep.mubr.bf16.mxu0 0
      %1230 = vmatmul.mubr.bf16.gmra.mxu0 %v1148
      %v1231 = vpop.f32.mrf.mxu0
      %v1232 = vadd.f32 0.0, %v1231
      %v1233 = vpop.f32.mrf.mxu0
      %v1234 = vpop.f32.mrf.mxu0
      %v1235 = vpop.f32.mrf.mxu0
      %1236 = vdwg.mxu0
      %v1237 = vadd.f32 %v1147, %v1232
      %v1238 = vtanh.pop %v1237
      %1239 = vst [vmem:[%s253] sm:$0xff] %v1238
      %v1240 = vld [vmem:[%s647] sm:$0xff]
      %v1241 = vpack.c.bf16 %v1238, %v1238
      %1242 = vmatprep.subr.bf16.mxu0 0
      %1243 = vmatpush1.bf16.xpose.msra.mxu0 %v1188
      %1244 = vmatprep.subr.bf16.mxu0 0
      %1245 = vmatpush1.bf16.xpose.msra.mxu0 %v1187
      %1246 = vmatprep.subr.bf16.mxu0 0
      %1247 = vmatpush1.bf16.xpose.msra.mxu0 %v1186
      %1248 = vmatprep.subr.bf16.mxu0 0
      %1249 = vmatpush1.bf16.xpose.msra.mxu0 %v1185
      %1250 = vmatprep.subr.bf16.mxu0 0
      %1251 = vmatpush1.bf16.xpose.msra.mxu0 %v1184
      %1252 = vmatprep.subr.bf16.mxu0 0
      %1253 = vmatpush1.bf16.xpose.msra.mxu0 %v1183
      %1254 = vmatprep.subr.bf16.mxu0 0
      %1255 = vmatpush1.bf16.xpose.msra.mxu0 %v1182
      %1256 = vmatprep.subr.bf16.mxu0 0
      %1257 = vmatpush1.bf16.xpose.msra.mxu0 %v1181
      %1258 = vmatprep.subr.bf16.mxu0 0
      %1259 = vmatpush2.bf16.xpose.msra.mxu0 0
      %1260 = vmatprep.subr.bf16.mxu0 0
      %1261 = vmatpush2.bf16.xpose.msra.mxu0 0
      %1262 = vmatprep.subr.bf16.mxu0 0
      %1263 = vmatpush2.bf16.xpose.msra.mxu0 0
      %1264 = vmatprep.subr.bf16.mxu0 0
      %1265 = vmatpush2.bf16.xpose.msra.mxu0 0
      %1266 = vmatprep.subr.bf16.mxu0 0
      %1267 = vmatpush2.bf16.xpose.msra.mxu0 0
      %1268 = vmatprep.subr.bf16.mxu0 0
      %1269 = vmatpush2.bf16.xpose.msra.mxu0 0
      %1270 = vmatprep.subr.bf16.mxu0 0
      %1271 = vmatpush2.bf16.xpose.msra.mxu0 0
      %1272 = vmatprep.subr.bf16.mxu0 0
      %1273 = vmatpush2.bf16.xpose.msra.mxu0 0
      %1274 = vmatprep.mubr.bf16.mxu0 0
      %1275 = vmatmul.mubr.bf16.gmra.mxu0 %v1241
      %v1276 = vpop.f32.mrf.mxu0
      %v1277 = vadd.f32 0.0, %v1276
      %v1278 = vpop.f32.mrf.mxu0
      %v1279 = vpop.f32.mrf.mxu0
      %v1280 = vpop.f32.mrf.mxu0
      %1281 = vdwg.mxu0
      %v1282 = vadd.f32 %v1240, %v1277
      %v1283 = vtanh.pop %v1282
      %1284 = vst [vmem:[%s647] sm:$0xff] %v1283
      %v1285 = vld [vmem:[%s693] sm:$0xff]
      %v1286 = vpack.c.bf16 %v1283, %v1283
      %1287 = vmatprep.subr.bf16.mxu0 0
      %1288 = vmatpush1.bf16.xpose.msra.mxu0 %v1188
      %1289 = vmatprep.subr.bf16.mxu0 0
      %1290 = vmatpush1.bf16.xpose.msra.mxu0 %v1187
      %1291 = vmatprep.subr.bf16.mxu0 0
      %1292 = vmatpush1.bf16.xpose.msra.mxu0 %v1186
      %1293 = vmatprep.subr.bf16.mxu0 0
      %1294 = vmatpush1.bf16.xpose.msra.mxu0 %v1185
      %1295 = vmatprep.subr.bf16.mxu0 0
      %1296 = vmatpush1.bf16.xpose.msra.mxu0 %v1184
      %1297 = vmatprep.subr.bf16.mxu0 0
      %1298 = vmatpush1.bf16.xpose.msra.mxu0 %v1183
      %1299 = vmatprep.subr.bf16.mxu0 0
      %1300 = vmatpush1.bf16.xpose.msra.mxu0 %v1182
      %1301 = vmatprep.subr.bf16.mxu0 0
      %1302 = vmatpush1.bf16.xpose.msra.mxu0 %v1181
      %1303 = vmatprep.subr.bf16.mxu0 0
      %1304 = vmatpush2.bf16.xpose.msra.mxu0 0
      %1305 = vmatprep.subr.bf16.mxu0 0
      %1306 = vmatpush2.bf16.xpose.msra.mxu0 0
      %1307 = vmatprep.subr.bf16.mxu0 0
      %1308 = vmatpush2.bf16.xpose.msra.mxu0 0
      %1309 = vmatprep.subr.bf16.mxu0 0
      %1310 = vmatpush2.bf16.xpose.msra.mxu0 0
      %1311 = vmatprep.subr.bf16.mxu0 0
      %1312 = vmatpush2.bf16.xpose.msra.mxu0 0
      %1313 = vmatprep.subr.bf16.mxu0 0
      %1314 = vmatpush2.bf16.xpose.msra.mxu0 0
      %1315 = vmatprep.subr.bf16.mxu0 0
      %1316 = vmatpush2.bf16.xpose.msra.mxu0 0
      %1317 = vmatprep.subr.bf16.mxu0 0
      %1318 = vmatpush2.bf16.xpose.msra.mxu0 0
      %1319 = vmatprep.mubr.bf16.mxu0 0
      %1320 = vmatmul.mubr.bf16.gmra.mxu0 %v1286
      %v1321 = vpop.f32.mrf.mxu0
      %v1322 = vadd.f32 0.0, %v1321
      %v1323 = vpop.f32.mrf.mxu0
      %v1324 = vpop.f32.mrf.mxu0
      %v1325 = vpop.f32.mrf.mxu0
      %1326 = vdwg.mxu0
      %v1327 = vadd.f32 %v1285, %v1322
      %v1328 = vtanh.pop %v1327
      %1329 = vst [vmem:[%s693] sm:$0xff] %v1328
      %v1330 = vld [vmem:[%s739] sm:$0xff]
      %v1331 = vpack.c.bf16 %v1328, %v1328
      %1332 = vmatprep.subr.bf16.mxu0 0
      %1333 = vmatpush1.bf16.xpose.msra.mxu0 %v1188
      %1334 = vmatprep.subr.bf16.mxu0 0
      %1335 = vmatpush1.bf16.xpose.msra.mxu0 %v1187
      %1336 = vmatprep.subr.bf16.mxu0 0
      %1337 = vmatpush1.bf16.xpose.msra.mxu0 %v1186
      %1338 = vmatprep.subr.bf16.mxu0 0
      %1339 = vmatpush1.bf16.xpose.msra.mxu0 %v1185
      %1340 = vmatprep.subr.bf16.mxu0 0
      %1341 = vmatpush1.bf16.xpose.msra.mxu0 %v1184
      %1342 = vmatprep.subr.bf16.mxu0 0
      %1343 = vmatpush1.bf16.xpose.msra.mxu0 %v1183
      %1344 = vmatprep.subr.bf16.mxu0 0
      %1345 = vmatpush1.bf16.xpose.msra.mxu0 %v1182
      %1346 = vmatprep.subr.bf16.mxu0 0
      %1347 = vmatpush1.bf16.xpose.msra.mxu0 %v1181
      %1348 = vmatprep.subr.bf16.mxu0 0
      %1349 = vmatpush2.bf16.xpose.msra.mxu0 0
      %1350 = vmatprep.subr.bf16.mxu0 0
      %1351 = vmatpush2.bf16.xpose.msra.mxu0 0
      %1352 = vmatprep.subr.bf16.mxu0 0
      %1353 = vmatpush2.bf16.xpose.msra.mxu0 0
      %1354 = vmatprep.subr.bf16.mxu0 0
      %1355 = vmatpush2.bf16.xpose.msra.mxu0 0
      %1356 = vmatprep.subr.bf16.mxu0 0
      %1357 = vmatpush2.bf16.xpose.msra.mxu0 0
      %1358 = vmatprep.subr.bf16.mxu0 0
      %1359 = vmatpush2.bf16.xpose.msra.mxu0 0
      %1360 = vmatprep.subr.bf16.mxu0 0
      %1361 = vmatpush2.bf16.xpose.msra.mxu0 0
      %1362 = vmatprep.subr.bf16.mxu0 0
      %1363 = vmatpush2.bf16.xpose.msra.mxu0 0
      %1364 = vmatprep.mubr.bf16.mxu0 0
      %1365 = vmatmul.mubr.bf16.gmra.mxu0 %v1331
      %v1366 = vpop.f32.mrf.mxu0
      %v1367 = vadd.f32 0.0, %v1366
      %v1368 = vpop.f32.mrf.mxu0
      %v1369 = vpop.f32.mrf.mxu0
      %v1370 = vpop.f32.mrf.mxu0
      %1371 = vdwg.mxu0
      %v1372 = vadd.f32 %v1330, %v1367
      %v1373 = vtanh.pop %v1372
      %1374 = vst [vmem:[%s739] sm:$0xff] %v1373
      %v1375 = vld [vmem:[%s785] sm:$0xff]
      %v1376 = vpack.c.bf16 %v1373, %v1373
      %1377 = vmatprep.subr.bf16.mxu0 0
      %1378 = vmatpush1.bf16.xpose.msra.mxu0 %v1188
      %1379 = vmatprep.subr.bf16.mxu0 0
      %1380 = vmatpush1.bf16.xpose.msra.mxu0 %v1187
      %1381 = vmatprep.subr.bf16.mxu0 0
      %1382 = vmatpush1.bf16.xpose.msra.mxu0 %v1186
      %1383 = vmatprep.subr.bf16.mxu0 0
      %1384 = vmatpush1.bf16.xpose.msra.mxu0 %v1185
      %1385 = vmatprep.subr.bf16.mxu0 0
      %1386 = vmatpush1.bf16.xpose.msra.mxu0 %v1184
      %1387 = vmatprep.subr.bf16.mxu0 0
      %1388 = vmatpush1.bf16.xpose.msra.mxu0 %v1183
      %1389 = vmatprep.subr.bf16.mxu0 0
      %1390 = vmatpush1.bf16.xpose.msra.mxu0 %v1182
      %1391 = vmatprep.subr.bf16.mxu0 0
      %1392 = vmatpush1.bf16.xpose.msra.mxu0 %v1181
      %1393 = vmatprep.subr.bf16.mxu0 0
      %1394 = vmatpush2.bf16.xpose.msra.mxu0 0
      %1395 = vmatprep.subr.bf16.mxu0 0
      %1396 = vmatpush2.bf16.xpose.msra.mxu0 0
      %1397 = vmatprep.subr.bf16.mxu0 0
      %1398 = vmatpush2.bf16.xpose.msra.mxu0 0
      %1399 = vmatprep.subr.bf16.mxu0 0
      %1400 = vmatpush2.bf16.xpose.msra.mxu0 0
      %1401 = vmatprep.subr.bf16.mxu0 0
      %1402 = vmatpush2.bf16.xpose.msra.mxu0 0
      %1403 = vmatprep.subr.bf16.mxu0 0
      %1404 = vmatpush2.bf16.xpose.msra.mxu0 0
      %1405 = vmatprep.subr.bf16.mxu0 0
      %1406 = vmatpush2.bf16.xpose.msra.mxu0 0
      %1407 = vmatprep.subr.bf16.mxu0 0
      %1408 = vmatpush2.bf16.xpose.msra.mxu0 0
      %1409 = vmatprep.mubr.bf16.mxu0 0
      %1410 = vmatmul.mubr.bf16.gmra.mxu0 %v1376
      %v1411 = vpop.f32.mrf.mxu0
      %v1412 = vadd.f32 0.0, %v1411
      %v1413 = vpop.f32.mrf.mxu0
      %v1414 = vpop.f32.mrf.mxu0
      %v1415 = vpop.f32.mrf.mxu0
      %1416 = vdwg.mxu0
      %v1417 = vadd.f32 %v1375, %v1412
      %v1418 = vtanh.pop %v1417
      %1419 = vst [vmem:[%s785] sm:$0xff] %v1418
      %v1420 = vld [vmem:[%s831] sm:$0xff]
      %v1421 = vpack.c.bf16 %v1418, %v1418
      %1422 = vmatprep.subr.bf16.mxu0 0
      %1423 = vmatpush1.bf16.xpose.msra.mxu0 %v1188
      %1424 = vmatprep.subr.bf16.mxu0 0
      %1425 = vmatpush1.bf16.xpose.msra.mxu0 %v1187
      %1426 = vmatprep.subr.bf16.mxu0 0
      %1427 = vmatpush1.bf16.xpose.msra.mxu0 %v1186
      %1428 = vmatprep.subr.bf16.mxu0 0
      %1429 = vmatpush1.bf16.xpose.msra.mxu0 %v1185
      %1430 = vmatprep.subr.bf16.mxu0 0
      %1431 = vmatpush1.bf16.xpose.msra.mxu0 %v1184
      %1432 = vmatprep.subr.bf16.mxu0 0
      %1433 = vmatpush1.bf16.xpose.msra.mxu0 %v1183
      %1434 = vmatprep.subr.bf16.mxu0 0
      %1435 = vmatpush1.bf16.xpose.msra.mxu0 %v1182
      %1436 = vmatprep.subr.bf16.mxu0 0
      %1437 = vmatpush1.bf16.xpose.msra.mxu0 %v1181
      %1438 = vmatprep.subr.bf16.mxu0 0
      %1439 = vmatpush2.bf16.xpose.msra.mxu0 0
      %1440 = vmatprep.subr.bf16.mxu0 0
      %1441 = vmatpush2.bf16.xpose.msra.mxu0 0
      %1442 = vmatprep.subr.bf16.mxu0 0
      %1443 = vmatpush2.bf16.xpose.msra.mxu0 0
      %1444 = vmatprep.subr.bf16.mxu0 0
      %1445 = vmatpush2.bf16.xpose.msra.mxu0 0
      %1446 = vmatprep.subr.bf16.mxu0 0
      %1447 = vmatpush2.bf16.xpose.msra.mxu0 0
      %1448 = vmatprep.subr.bf16.mxu0 0
      %1449 = vmatpush2.bf16.xpose.msra.mxu0 0
      %1450 = vmatprep.subr.bf16.mxu0 0
      %1451 = vmatpush2.bf16.xpose.msra.mxu0 0
      %1452 = vmatprep.subr.bf16.mxu0 0
      %1453 = vmatpush2.bf16.xpose.msra.mxu0 0
      %1454 = vmatprep.mubr.bf16.mxu0 0
      %1455 = vmatmul.mubr.bf16.gmra.mxu0 %v1421
      %v1456 = vpop.f32.mrf.mxu0
      %v1457 = vadd.f32 0.0, %v1456
      %v1458 = vpop.f32.mrf.mxu0
      %v1459 = vpop.f32.mrf.mxu0
      %v1460 = vpop.f32.mrf.mxu0
      %1461 = vdwg.mxu0
      %v1462 = vadd.f32 %v1420, %v1457
      %v1463 = vtanh.pop %v1462
      %1464 = vst [vmem:[%s831] sm:$0xff] %v1463
      %v1465 = vld [vmem:[%s877] sm:$0xff]
      %v1466 = vpack.c.bf16 %v1463, %v1463
      %1467 = vmatprep.subr.bf16.mxu0 0
      %1468 = vmatpush1.bf16.xpose.msra.mxu0 %v1188
      %1469 = vmatprep.subr.bf16.mxu0 0
      %1470 = vmatpush1.bf16.xpose.msra.mxu0 %v1187
      %1471 = vmatprep.subr.bf16.mxu0 0
      %1472 = vmatpush1.bf16.xpose.msra.mxu0 %v1186
      %1473 = vmatprep.subr.bf16.mxu0 0
      %1474 = vmatpush1.bf16.xpose.msra.mxu0 %v1185
      %1475 = vmatprep.subr.bf16.mxu0 0
      %1476 = vmatpush1.bf16.xpose.msra.mxu0 %v1184
      %1477 = vmatprep.subr.bf16.mxu0 0
      %1478 = vmatpush1.bf16.xpose.msra.mxu0 %v1183
      %1479 = vmatprep.subr.bf16.mxu0 0
      %1480 = vmatpush1.bf16.xpose.msra.mxu0 %v1182
      %1481 = vmatprep.subr.bf16.mxu0 0
      %1482 = vmatpush1.bf16.xpose.msra.mxu0 %v1181
      %1483 = vmatprep.subr.bf16.mxu0 0
      %1484 = vmatpush2.bf16.xpose.msra.mxu0 0
      %1485 = vmatprep.subr.bf16.mxu0 0
      %1486 = vmatpush2.bf16.xpose.msra.mxu0 0
      %1487 = vmatprep.subr.bf16.mxu0 0
      %1488 = vmatpush2.bf16.xpose.msra.mxu0 0
      %1489 = vmatprep.subr.bf16.mxu0 0
      %1490 = vmatpush2.bf16.xpose.msra.mxu0 0
      %1491 = vmatprep.subr.bf16.mxu0 0
      %1492 = vmatpush2.bf16.xpose.msra.mxu0 0
      %1493 = vmatprep.subr.bf16.mxu0 0
      %1494 = vmatpush2.bf16.xpose.msra.mxu0 0
      %1495 = vmatprep.subr.bf16.mxu0 0
      %1496 = vmatpush2.bf16.xpose.msra.mxu0 0
      %1497 = vmatprep.subr.bf16.mxu0 0
      %1498 = vmatpush2.bf16.xpose.msra.mxu0 0
      %1499 = vmatprep.mubr.bf16.mxu0 0
      %1500 = vmatmul.mubr.bf16.gmra.mxu0 %v1466
      %v1501 = vpop.f32.mrf.mxu0
      %v1502 = vadd.f32 0.0, %v1501
      %v1503 = vpop.f32.mrf.mxu0
      %v1504 = vpop.f32.mrf.mxu0
      %v1505 = vpop.f32.mrf.mxu0
      %1506 = vdwg.mxu0
      %v1507 = vadd.f32 %v1465, %v1502
      %v1508 = vtanh.pop %v1507
      %1509 = vst [vmem:[%s877] sm:$0xff] %v1508
      %v1510 = vld [vmem:[%s923] sm:$0xff]
      %v1511 = vpack.c.bf16 %v1508, %v1508
      %1512 = vmatprep.subr.bf16.mxu0 0
      %1513 = vmatpush1.bf16.xpose.msra.mxu0 %v1188
      %1514 = vmatprep.subr.bf16.mxu0 0
      %1515 = vmatpush1.bf16.xpose.msra.mxu0 %v1187
      %1516 = vmatprep.subr.bf16.mxu0 0
      %1517 = vmatpush1.bf16.xpose.msra.mxu0 %v1186
      %1518 = vmatprep.subr.bf16.mxu0 0
      %1519 = vmatpush1.bf16.xpose.msra.mxu0 %v1185
      %1520 = vmatprep.subr.bf16.mxu0 0
      %1521 = vmatpush1.bf16.xpose.msra.mxu0 %v1184
      %1522 = vmatprep.subr.bf16.mxu0 0
      %1523 = vmatpush1.bf16.xpose.msra.mxu0 %v1183
      %1524 = vmatprep.subr.bf16.mxu0 0
      %1525 = vmatpush1.bf16.xpose.msra.mxu0 %v1182
      %1526 = vmatprep.subr.bf16.mxu0 0
      %1527 = vmatpush1.bf16.xpose.msra.mxu0 %v1181
      %1528 = vmatprep.subr.bf16.mxu0 0
      %1529 = vmatpush2.bf16.xpose.msra.mxu0 0
      %1530 = vmatprep.subr.bf16.mxu0 0
      %1531 = vmatpush2.bf16.xpose.msra.mxu0 0
      %1532 = vmatprep.subr.bf16.mxu0 0
      %1533 = vmatpush2.bf16.xpose.msra.mxu0 0
      %1534 = vmatprep.subr.bf16.mxu0 0
      %1535 = vmatpush2.bf16.xpose.msra.mxu0 0
      %1536 = vmatprep.subr.bf16.mxu0 0
      %1537 = vmatpush2.bf16.xpose.msra.mxu0 0
      %1538 = vmatprep.subr.bf16.mxu0 0
      %1539 = vmatpush2.bf16.xpose.msra.mxu0 0
      %1540 = vmatprep.subr.bf16.mxu0 0
      %1541 = vmatpush2.bf16.xpose.msra.mxu0 0
      %1542 = vmatprep.subr.bf16.mxu0 0
      %1543 = vmatpush2.bf16.xpose.msra.mxu0 0
      %1544 = vmatprep.mubr.bf16.mxu0 0
      %1545 = vmatmul.mubr.bf16.gmra.mxu0 %v1511
      %v1546 = vpop.f32.mrf.mxu0
      %v1547 = vadd.f32 0.0, %v1546
      %v1548 = vpop.f32.mrf.mxu0
      %v1549 = vpop.f32.mrf.mxu0
      %v1550 = vpop.f32.mrf.mxu0
      %1551 = vdwg.mxu0
      %v1552 = vadd.f32 %v1510, %v1547
      %v1553 = vtanh.pop %v1552
      %1554 = vst [vmem:[%s923] sm:$0xff] %v1553
      %1555 = vst [vmem:[%s1145] sm:$0xff] %v1553
      %s1556 = smul.u32 8, %s17
      %p1557 = scmp.lt.s32.totalorder %s1556, 15
      %s1558 = scalar_select %p1557, %s1556, 15
      %s1559 = smul.addr %s1558, 8
      %s1560 = scalar_lea.vmem %s6, %s1559
      // Predicated region
      $region49: #{rnnlm_forward.2} parent=43 // pred_check
        %p1561 = pneg %p166
      $region50: #{rnnlm_forward.2} parent=43 // pred_check_branch
        %1563 = sbr.rel (%p1561) target = $region52
      $region51: #{rnnlm_forward.2} parent=43 // pred_region
        %s1564 = smul.u32 8, %s17
      $region52: #{rnnlm_forward.2} parent=43 // pred_fallthru
        _
    $region44: #{rnnlm_forward.2} parent=5 // pred_fallthru
      _
    %p1565 = scmp.le.s32.totalorder 2, %s12
    // Predicated region
    $region53: #{rnnlm_forward.2} parent=5 // pred_check
      %p1566 = pneg %p1565
    $region54: #{rnnlm_forward.2} parent=5 // pred_check_branch
      %1568 = sbr.rel (%p1566) target = $region56
    $region55: #{rnnlm_forward.2} parent=5 // pred_region
      %s1569 = ssub.s32 %s12, 2
      // Predicated region
      $region57: #{rnnlm_forward.2} parent=55 // pred_check
        %p1570 = pneg %p172
      $region58: #{rnnlm_forward.2} parent=55 // pred_check_branch
        %1572 = sbr.rel (%p1570) target = $region60
      $region59: #{rnnlm_forward.2} parent=55 // pred_region
        %s1573 = smul.u32 8, %s18
        %p1574 = scmp.lt.s32.totalorder %s1573, 15
        %s1575 = scalar_select %p1574, %s1573, 15
        %s1576 = smul.addr %s1575, 8
        %s1577 = scalar_lea.vmem %s6, %s1576
      $region60: #{rnnlm_forward.2} parent=55 // pred_fallthru
        _
    $region56: #{rnnlm_forward.2} parent=5 // pred_fallthru
      _
  $region6: #{rnnlm_forward.2} parent=0 // loop_footer
    %s16 = sadd.s32 1, %s12
  $region7: #{rnnlm_forward.2} parent=0 // loop_footer_branch
    %11 = sbr.rel target = $region3
  $region8: #{rnnlm_forward.2} parent=0 // loop_exit
    _

</llo_original>
